<compile_context>
chip_gen: v6e
topology: v6e:2x2x1
jax: 0.10.0
libtpu: 0.0.40
codegen_flags: <defaults>
</compile_context>

<pallas_src>
import jax
import jax.numpy as jnp
import numpy as np
from jax import lax
from jax.experimental import pallas as pl
from jax.experimental.pallas import tpu as pltpu

EPS = 1e-5


# ---------------------------------------------------------------------------
# Hardware-aware defaults
# ---------------------------------------------------------------------------
def _vmem_limit_bytes():
  """Per-generation VMEM limit: physical capacity minus 16 MiB headroom for
  Mosaic internal scratch / double-buffered BlockSpec allocations. Never
  requests the full physical budget (v7x only has 64 MiB per TensorCore)."""
  try:
    cap = int(pltpu.get_tpu_info().vmem_capacity_bytes)
    return max(32 << 20, cap - (16 << 20))
  except Exception:
    return 48 << 20          # safe on every generation


def _default_k_taps():
  """All-9-tap K-fold (one K=9*Cin matmul per tile) on 256-deep MXUs
  (v6e/v7x); 3-tap fold on 128-deep MXUs (v4/v5)."""
  try:
    kind = jax.devices()[0].device_kind.lower()
    if "v4" in kind or "v5" in kind:
      return 3
  except Exception:
    pass
  return 9


def _pick_tile_rows(Ho, Wo, stride, W, Cin, Cout, k_taps, has_proj,
                    inter_isize, budget, max_out_rows=None):
  """Largest divisor TH of Ho whose estimated live per-step VMEM footprint
  (double-buffered I/O blocks + padded tile + im2col temporaries + f32
  accumulator) fits inside `budget` bytes."""
  best = 1
  for th in range(1, Ho + 1):
    if Ho % th:
      continue
    if max_out_rows is not None and th > max_out_rows:
      continue
    th_in = th * stride
    f32 = 4
    est = 0
    est += 2 * th_in * W * Cin * f32            # main input block (x2 buffers)
    est += 4 * W * Cin * f32                    # halo row blocks
    est += 2 * th * Wo * Cout * inter_isize     # y / o output block
    if has_proj:
      est += 2 * th * Wo * Cout * inter_isize   # projection shortcut block
    est += (th_in + 2) * (W + 2) * Cin * f32    # padded activation tile
    est += th * Wo * 9 * Cin * f32              # im2col tap temporaries
    est += th * Wo * Cout * f32                 # f32 accumulator
    if est * 2 <= budget:                       # 2x safety for compiler temps
      best = th
  return best


def _fold_weights(w, k_taps, mxu_dtype):
  """(3,3,Cin,Cout) HWIO -> (9//k_taps, k_taps*Cin, Cout), cast for the MXU."""
  _, _, cin, cout = w.shape
  return w.reshape(9 // k_taps, k_taps * cin, cout).astype(mxu_dtype)


# ---------------------------------------------------------------------------
# In-kernel helpers
# ---------------------------------------------------------------------------
def _padded_tile(top, main, bot):
  """Assemble the zero-padded activation tile (TH_in+2, W+2, C) from the
  bn+relu'd halo rows and interior. W padding is done with a register-side
  concatenate (one sublane concat) instead of per-column masked stores."""
  rows = jnp.concatenate([top, main, bot], axis=0)          # (TH_in+2, W, C)
  zc = jnp.zeros((rows.shape[0], 1, rows.shape[-1]), jnp.float32)
  return jnp.concatenate([zc, rows, zc], axis=1)            # (TH_in+2, W+2, C)


def _decimate_w(ap, stride):
  """Parity-decimate the W (sublane) axis once: `stride` planes, after which
  every conv tap is a contiguous slice along W (no per-tap sublane-strided
  relayout). Row striding stays on the leading axis (slab selection)."""
  if stride == 1:
    return [ap]
  Hp, Wp, C = ap.shape
  return [lax.slice(ap, (0, pw, 0), (Hp, Wp, C), (1, stride, 1))
          for pw in range(stride)]


def _conv3x3_from_planes(planes, w_ref, Ho_t, Wo, Cin, Cout, stride, k_taps,
                         mxu_dtype):
  """3x3 conv over a zero-padded activation tile (already W-decimated into
  `planes`), producing an (Ho_t*Wo, Cout) f32 accumulator.

  Taps are K-folded into groups of `k_taps` (3 or 9) so the MXU runs
  9//k_taps fat matmuls with K = k_taps*Cin instead of 9 thin ones."""
  s = stride

  def tap(kh, kw):
    pw, c0 = kw % s, kw // s
    return lax.slice(planes[pw],
                     (kh, c0, 0),
                     (kh + s * (Ho_t - 1) + 1, c0 + Wo, Cin),
                     (s, 1, 1))

  n_groups = 9 // k_taps
  acc = None
  for g in range(n_groups):
    taps = [tap((g * k_taps + t) // 3, (g * k_taps + t) % 3)
            for t in range(k_taps)]
    patch = jnp.concatenate(taps, axis=-1).reshape(Ho_t * Wo, k_taps * Cin)
    part = jnp.dot(patch.astype(mxu_dtype), w_ref[g],
                   preferred_element_type=jnp.float32)
    acc = part if acc is None else acc + part
  return acc


# ---------------------------------------------------------------------------
# Stage 1: bn1 + relu + conv1 (+ fused 1x1 shortcut) (+ partial BN2 stats)
# ---------------------------------------------------------------------------
def _make_stage1_kernel(TH_out, Wo, Cin, Cout, stride, has_proj, k_taps,
                        mxu_dtype):

  def kernel(*refs):
    if has_proj:
      (xm_ref, xt_ref, xb_ref, scale_ref, shift_ref, w_ref, ws_ref,
       y_ref, stat_ref, sc_ref) = refs
    else:
      (xm_ref, xt_ref, xb_ref, scale_ref, shift_ref, w_ref,
       y_ref, stat_ref) = refs

    i = pl.program_id(1)
    n_tiles = pl.num_programs(1)
    scale = scale_ref[...].reshape(1, 1, Cin)
    shift = shift_ref[...].reshape(1, 1, Cin)

    def bnrelu(v):
      return jnp.maximum(v.astype(jnp.float32) * scale + shift, 0.0)

    main = bnrelu(xm_ref[0])                                 # (TH_in, W, Cin)
    # Halo rows: real neighbouring rows for interior tiles, exact zeros at the
    # image boundary (conv padding applies AFTER bn+relu in the reference).
    top = bnrelu(xt_ref[0]) * (i > 0).astype(jnp.float32)
    bot = bnrelu(xb_ref[0]) * (i < n_tiles - 1).astype(jnp.float32)
    ap = _padded_tile(top, main, bot)                        # (TH_in+2, W+2, Cin)

    planes = _decimate_w(ap, stride)
    acc = _conv3x3_from_planes(planes, w_ref, TH_out, Wo, Cin, Cout, stride,
                               k_taps, mxu_dtype)            # (TH_out*Wo, Cout)

    # Per-tile partial BN2 statistics (sum / sum-of-squares) from the f32
    # accumulator, so y1 never has to be re-read from HBM for mean/var.
    psum = jnp.sum(acc, axis=0, keepdims=True)               # (1, Cout)
    psqs = jnp.sum(acc * acc, axis=0, keepdims=True)         # (1, Cout)
    stat_ref[...] = jnp.concatenate([psum, psqs], axis=0).reshape(1, 1, 2, Cout)

    y_ref[0] = acc.reshape(TH_out, Wo, Cout).astype(y_ref.dtype)

    if has_proj:
      # Fused 1x1 strided projection shortcut from the already-resident tile.
      s = stride
      sc_in = lax.slice(planes[1 % s],
                        (1, 1 // s, 0),
                        (1 + s * (TH_out - 1) + 1, 1 // s + Wo, Cin),
                        (s, 1, 1))
      sc = jnp.dot(sc_in.reshape(TH_out * Wo, Cin).astype(mxu_dtype),
                   ws_ref[...], preferred_element_type=jnp.float32)
      sc_ref[0] = sc.reshape(TH_out, Wo, Cout).astype(sc_ref.dtype)

  return kernel


# ---------------------------------------------------------------------------
# Stage 2: bn2 + relu + conv2 + residual add
# ---------------------------------------------------------------------------
def _make_stage2_kernel(TH, Cin, P, identity_shortcut, k_taps, mxu_dtype):

  def kernel(*refs):
    if identity_shortcut:
      (ym_ref, yt_ref, yb_ref, scale_ref, shift_ref, w_ref,
       xr_ref, s1_ref, b1_ref, o_ref) = refs
    else:
      (ym_ref, yt_ref, yb_ref, scale_ref, shift_ref, w_ref,
       sc_ref, o_ref) = refs

    i = pl.program_id(1)
    n_tiles = pl.num_programs(1)
    scale = scale_ref[...].reshape(1, 1, P)
    shift = shift_ref[...].reshape(1, 1, P)

    def bnrelu2(v):
      return jnp.maximum(v.astype(jnp.float32) * scale + shift, 0.0)

    main = bnrelu2(ym_ref[0])                                # (TH, Wo, P)
    top = bnrelu2(yt_ref[0]) * (i > 0).astype(jnp.float32)
    bot = bnrelu2(yb_ref[0]) * (i < n_tiles - 1).astype(jnp.float32)
    ap = _padded_tile(top, main, bot)                        # (TH+2, Wo+2, P)

    Wo = main.shape[1]
    acc = _conv3x3_from_planes(_decimate_w(ap, 1), w_ref, TH, Wo, P, P, 1,
                               k_taps, mxu_dtype)
    out = acc.reshape(TH, Wo, P)

    if identity_shortcut:
      # Identity shortcut = relu(bn1(x)); recomputed on the VPU from the raw
      # input tile instead of round-tripping the activation through HBM.
      xr = xr_ref[0].astype(jnp.float32)
      res = jnp.maximum(xr * s1_ref[...].reshape(1, 1, Cin)
                        + b1_ref[...].reshape(1, 1, Cin), 0.0)
    else:
      res = sc_ref[0].astype(jnp.float32)

    o_ref[0] = (out + res).astype(o_ref.dtype)

  return kernel


# ---------------------------------------------------------------------------
# Public wrapper
# ---------------------------------------------------------------------------
def preact_block_forward(x_nchw, params, stride, mxu_dtype=jnp.bfloat16,
                         k_taps=None, max_out_rows=None):
  """Forward pass of PreActBlock. Input/output are NCHW (PyTorch convention)."""
  x = jnp.transpose(x_nchw, (0, 2, 3, 1)).astype(jnp.float32)   # -> NHWC
  N, H, W, Cin = x.shape
  P = params["w1"].shape[-1]                                    # planes
  Ho = (H - 1) // stride + 1
  Wo = (W - 1) // stride + 1
  has_proj = (stride != 1) or (Cin != P)
  if k_taps is None:
    k_taps = _default_k_taps()
  assert 9 % k_taps == 0

  # Intermediates (y1, projection shortcut) round-trip HBM in bf16 when the
  # MXU path is bf16 -- the block is memory bound, this halves those bytes.
  inter_dtype = (jnp.float32 if jnp.dtype(mxu_dtype) == jnp.dtype(jnp.float32)
                 else jnp.bfloat16)
  vmem_limit = _vmem_limit_bytes()

  # BN1 training-mode batch statistics in one fused sum / sum-of-squares pass
  # (avoids a second full read of x for jnp.var).
  cnt1 = float(N * H * W)
  xs = jnp.sum(x, axis=(0, 1, 2))
  xss = jnp.sum(x * x, axis=(0, 1, 2))
  m1 = xs / cnt1
  v1 = xss / cnt1 - m1 * m1
  s1 = params["gamma1"] / jnp.sqrt(v1 + EPS)
  b1 = params["beta1"] - m1 * s1
  scale1 = s1.reshape(1, Cin).astype(jnp.float32)
  shift1 = b1.reshape(1, Cin).astype(jnp.float32)

  # Spatial tiling along H: TH_out output rows per grid step (+1-row halo
  # delivered as two extra single-row BlockSpec views).
  TH_out = _pick_tile_rows(Ho, Wo, stride, W, Cin, P, k_taps, has_proj,
                           jnp.dtype(inter_dtype).itemsize,
                           budget=vmem_limit // 3, max_out_rows=max_out_rows)
  nH = Ho // TH_out
  TH_in = TH_out * stride

  w1f = _fold_weights(params["w1"], k_taps, mxu_dtype)

  in_specs = [
      pl.BlockSpec((1, TH_in, W, Cin), lambda n, i: (n, i, 0, 0)),
      pl.BlockSpec((1, 1, W, Cin),
                   lambda n, i: (n, jnp.maximum(i * TH_in - 1, 0), 0, 0)),
      pl.BlockSpec((1, 1, W, Cin),
                   lambda n, i: (n, jnp.minimum((i + 1) * TH_in, H - 1), 0, 0)),
      pl.BlockSpec((1, Cin), lambda n, i: (0, 0)),
      pl.BlockSpec((1, Cin), lambda n, i: (0, 0)),
      pl.BlockSpec(w1f.shape, lambda n, i: (0, 0, 0)),
  ]
  inputs = [x, x, x, scale1, shift1, w1f]
  out_shape1 = [jax.ShapeDtypeStruct((N, Ho, Wo, P), inter_dtype),
                jax.ShapeDtypeStruct((N, nH, 2, P), jnp.float32)]
  out_specs1 = [pl.BlockSpec((1, TH_out, Wo, P), lambda n, i: (n, i, 0, 0)),
                pl.BlockSpec((1, 1, 2, P), lambda n, i: (n, i, 0, 0))]
  if has_proj:
    inputs.append(params["ws"].astype(mxu_dtype))
    in_specs.append(pl.BlockSpec((Cin, P), lambda n, i: (0, 0)))
    out_shape1.append(jax.ShapeDtypeStruct((N, Ho, Wo, P), inter_dtype))
    out_specs1.append(pl.BlockSpec((1, TH_out, Wo, P),
                                   lambda n, i: (n, i, 0, 0)))

  stage1 = pl.pallas_call(
      _make_stage1_kernel(TH_out, Wo, Cin, P, stride, has_proj, k_taps,
                          mxu_dtype),
      out_shape=tuple(out_shape1),
      grid_spec=pltpu.PrefetchScalarGridSpec(
          num_scalar_prefetch=0,
          grid=(N, nH),
          in_specs=in_specs,
          out_specs=tuple(out_specs1)),
      compiler_params=pltpu.CompilerParams(
          dimension_semantics=("parallel", "parallel"),
          vmem_limit_bytes=vmem_limit),
  )
  outs = stage1(*inputs)
  if has_proj:
    y1, stats, shortcut = outs
  else:
    y1, stats = outs
    shortcut = None

  # Finish BN2 statistics from the in-kernel partial sums (biased variance).
  # NOTE: stats come from the f32 accumulator; when y1 is stored in bf16 the
  # renormalization is computed from the pre-cast values (numerically benign).
  tot = jnp.sum(stats, axis=(0, 1))             # (2, P)
  cnt2 = float(N * Ho * Wo)
  m2 = tot[0] / cnt2
  v2 = tot[1] / cnt2 - m2 * m2
  s2 = params["gamma2"] / jnp.sqrt(v2 + EPS)
  b2 = params["beta2"] - m2 * s2
  scale2 = s2.reshape(1, P).astype(jnp.float32)
  shift2 = b2.reshape(1, P).astype(jnp.float32)

  w2f = _fold_weights(params["w2"], k_taps, mxu_dtype)

  in_specs2 = [
      pl.BlockSpec((1, TH_out, Wo, P), lambda n, i: (n, i, 0, 0)),
      pl.BlockSpec((1, 1, Wo, P),
                   lambda n, i: (n, jnp.maximum(i * TH_out - 1, 0), 0, 0)),
      pl.BlockSpec((1, 1, Wo, P),
                   lambda n, i: (n, jnp.minimum((i + 1) * TH_out, Ho - 1),
                                 0, 0)),
      pl.BlockSpec((1, P), lambda n, i: (0, 0)),
      pl.BlockSpec((1, P), lambda n, i: (0, 0)),
      pl.BlockSpec(w2f.shape, lambda n, i: (0, 0, 0)),
  ]
  inputs2 = [y1, y1, y1, scale2, shift2, w2f]
  if has_proj:
    inputs2.append(shortcut)
    in_specs2.append(pl.BlockSpec((1, TH_out, Wo, P),
                                  lambda n, i: (n, i, 0, 0)))
  else:
    # TODO(synk): alternatively emit the bn1+relu activation in bf16 from
    # stage 1 and consume it here to drop the bn1 recompute entirely.
    inputs2 += [x, scale1, shift1]
    in_specs2 += [pl.BlockSpec((1, TH_out, W, Cin), lambda n, i: (n, i, 0, 0)),
                  pl.BlockSpec((1, Cin), lambda n, i: (0, 0)),
                  pl.BlockSpec((1, Cin), lambda n, i: (0, 0))]

  y2 = pl.pallas_call(
      _make_stage2_kernel(TH_out, Cin, P, not has_proj, k_taps, mxu_dtype),
      out_shape=jax.ShapeDtypeStruct((N, Ho, Wo, P), x.dtype),
      grid_spec=pltpu.PrefetchScalarGridSpec(
          num_scalar_prefetch=0,
          grid=(N, nH),
          in_specs=in_specs2,
          out_specs=pl.BlockSpec((1, TH_out, Wo, P),
                                 lambda n, i: (n, i, 0, 0))),
      compiler_params=pltpu.CompilerParams(
          dimension_semantics=("parallel", "parallel"),
          vmem_limit_bytes=vmem_limit),
  )(*inputs2)

  return jnp.transpose(y2, (0, 3, 1, 2))                        # -> NCHW


# ---------------------------------------------------------------------------
# Pure-JAX (XLA) reference mirroring the PyTorch module, for validation.
# ---------------------------------------------------------------------------
def reference_forward(x_nchw, params, stride):
  x = jnp.transpose(x_nchw, (0, 2, 3, 1)).astype(jnp.float32)

  def bn(z, g, b):
    m = jnp.mean(z, axis=(0, 1, 2))
    v = jnp.var(z, axis=(0, 1, 2))
    return (z - m) / jnp.sqrt(v + EPS) * g + b

  def conv(z, w, s, pad):
    return lax.conv_general_dilated(
        z, w, window_strides=(s, s), padding=pad,
        dimension_numbers=("NHWC", "HWIO", "NHWC"))

  out = jax.nn.relu(bn(x, params["gamma1"], params["beta1"]))
  if stride != 1 or x.shape[-1] != params["w1"].shape[-1]:
    shortcut = conv(out, params["ws"][None, None], stride, "VALID")
  else:
    shortcut = out
  out = conv(out, params["w1"], stride, [(1, 1), (1, 1)])
  out = jax.nn.relu(bn(out, params["gamma2"], params["beta2"]))
  out = conv(out, params["w2"], 1, [(1, 1), (1, 1)])
  out = out + shortcut
  return jnp.transpose(out, (0, 3, 1, 2))


if __name__ == "__main__":
  key = jax.random.PRNGKey(0)
  N, C, H, W = 2, 4, 16, 16
  kx, kp1, kp2, kp3 = jax.random.split(key, 4)
  x = jax.random.normal(kx, (N, C, H, W), jnp.float32)

  def make_params(k, cin, planes):
    k2, k3, k4 = jax.random.split(k, 3)
    return {
        "gamma1": jnp.ones((cin,), jnp.float32),
        "beta1": jnp.zeros((cin,), jnp.float32),
        "gamma2": jnp.ones((planes,), jnp.float32),
        "beta2": jnp.zeros((planes,), jnp.float32),
        "w1": 0.1 * jax.random.normal(k2, (3, 3, cin, planes), jnp.float32),
        "w2": 0.1 * jax.random.normal(k3, (3, 3, planes, planes), jnp.float32),
        "ws": 0.1 * jax.random.normal(k4, (cin, planes), jnp.float32),
    }

  # Config A: identity shortcut (stride=1, in_planes == planes), forced into
  # 2 H-tiles to exercise the halo path; both K-fold variants in f32.
  pA = make_params(kp1, C, C)
  refA = jax.block_until_ready(reference_forward(x, pA, 1))
  for kt in (3, 9):
    outA32 = jax.block_until_ready(
        preact_block_forward(x, pA, 1, mxu_dtype=jnp.float32,
                             k_taps=kt, max_out_rows=8))
    assert outA32.shape == refA.shape == (N, C, H, W)
    np.testing.assert_allclose(np.asarray(outA32), np.asarray(refA),
                               rtol=1e-4, atol=1e-4)
  outA16 = jax.block_until_ready(
      preact_block_forward(x, pA, 1, mxu_dtype=jnp.bfloat16, max_out_rows=8))
  np.testing.assert_allclose(np.asarray(outA16), np.asarray(refA),
                             rtol=3e-2, atol=3e-2)

  # Config B: projection (1x1 conv) shortcut, in_planes != planes, stride=1,
  # default (single-tile) tiling and default K-fold for this chip.
  planesB = 8
  pB = make_params(kp2, C, planesB)
  refB = jax.block_until_ready(reference_forward(x, pB, 1))
  outB32 = jax.block_until_ready(
      preact_block_forward(x, pB, 1, mxu_dtype=jnp.float32))
  assert outB32.shape == refB.shape == (N, planesB, H, W)
  np.testing.assert_allclose(np.asarray(outB32), np.asarray(refB),
                             rtol=1e-4, atol=1e-4)
  outB16 = jax.block_until_ready(
      preact_block_forward(x, pB, 1, mxu_dtype=jnp.bfloat16))
  np.testing.assert_allclose(np.asarray(outB16), np.asarray(refB),
                             rtol=3e-2, atol=3e-2)

  # Config C: stride=2 projection shortcut (parity-decimated im2col path),
  # forced into 2 H-tiles.
  pC = make_params(kp3, C, planesB)
  refC = jax.block_until_ready(reference_forward(x, pC, 2))
  outC32 = jax.block_until_ready(
      preact_block_forward(x, pC, 2, mxu_dtype=jnp.float32, max_out_rows=4))
  assert outC32.shape == refC.shape == (N, planesB, H // 2, W // 2)
  np.testing.assert_allclose(np.asarray(outC32), np.asarray(refC),
                             rtol=1e-4, atol=1e-4)
  outC16 = jax.block_until_ready(
      preact_block_forward(x, pC, 2, mxu_dtype=jnp.bfloat16, max_out_rows=4))
  np.testing.assert_allclose(np.asarray(outC16), np.asarray(refC),
                             rtol=3e-2, atol=3e-2)

  print("KERNEL_OK")
</pallas_src>

<mosaic_0001>
module attributes {stable_mosaic.version = 11 : i64} {
  func.func @kernel(%arg0: i32, %arg1: i32, %arg2: memref<1x8x16x4xf32, #tpu.memory_space<vmem>>, %arg3: memref<1x1x16x4xf32, #tpu.memory_space<vmem>>, %arg4: memref<1x1x16x4xf32, #tpu.memory_space<vmem>>, %arg5: memref<1x4xf32, #tpu.memory_space<vmem>>, %arg6: memref<1x4xf32, #tpu.memory_space<vmem>>, %arg7: memref<3x12x4xf32, #tpu.memory_space<vmem>>, %arg8: memref<1x8x16x4xf32, #tpu.memory_space<vmem>>, %arg9: memref<1x1x2x4xf32, #tpu.memory_space<vmem>>) attributes {dimension_semantics = [#tpu.dimension_semantics<parallel>, #tpu.dimension_semantics<parallel>], iteration_bounds = array<i64: 2, 2>, scalar_prefetch = 0 : i64, scratch_operands = 0 : i64, tpu.core_type = #tpu.core_type<tc>, window_params = [{transform_indices = @transform_0, window_bounds = array<i64: 1, 8, 16, 4>}, {transform_indices = @transform_1, window_bounds = array<i64: 1, 1, 16, 4>}, {transform_indices = @transform_2, window_bounds = array<i64: 1, 1, 16, 4>}, {pipeline_mode = #tpu.pipeline_mode<synchronous>, transform_indices = @transform_3, window_bounds = array<i64: 1, 4>}, {pipeline_mode = #tpu.pipeline_mode<synchronous>, transform_indices = @transform_4, window_bounds = array<i64: 1, 4>}, {pipeline_mode = #tpu.pipeline_mode<synchronous>, transform_indices = @transform_5, window_bounds = array<i64: 3, 12, 4>}, {transform_indices = @transform_6, window_bounds = array<i64: 1, 8, 16, 4>}, {transform_indices = @transform_7, window_bounds = array<i64: 1, 1, 2, 4>}]} {
    %c0 = arith.constant 0 : index
    %c0_0 = arith.constant 0 : index
    %0 = vector.load %arg5[%c0, %c0_0] : memref<1x4xf32, #tpu.memory_space<vmem>>, vector<1x4xf32>
    %1 = vector.shape_cast %0 : vector<1x4xf32> to vector<1x1x4xf32>
    %c0_1 = arith.constant 0 : index
    %c0_2 = arith.constant 0 : index
    %2 = vector.load %arg6[%c0_1, %c0_2] : memref<1x4xf32, #tpu.memory_space<vmem>>, vector<1x4xf32>
    %3 = vector.shape_cast %2 : vector<1x4xf32> to vector<1x1x4xf32>
    %c0_3 = arith.constant 0 : index
    %c0_4 = arith.constant 0 : index
    %c0_5 = arith.constant 0 : index
    %c0_6 = arith.constant 0 : index
    %4 = vector.load %arg2[%c0_3, %c0_4, %c0_5, %c0_6] : memref<1x8x16x4xf32, #tpu.memory_space<vmem>>, vector<1x8x16x4xf32>
    %5 = vector.shape_cast %4 : vector<1x8x16x4xf32> to vector<8x16x4xf32>
    %6 = vector.broadcast %1 : vector<1x1x4xf32> to vector<8x16x4xf32>
    %7 = arith.mulf %5, %6 : vector<8x16x4xf32>
    %8 = vector.broadcast %3 : vector<1x1x4xf32> to vector<8x16x4xf32>
    %9 = arith.addf %7, %8 : vector<8x16x4xf32>
    %cst = arith.constant 0.000000e+00 : f32
    %10 = vector.broadcast %cst : f32 to vector<8x16x4xf32>
    %11 = arith.maximumf %9, %10 : vector<8x16x4xf32>
    %c0_7 = arith.constant 0 : index
    %c0_8 = arith.constant 0 : index
    %c0_9 = arith.constant 0 : index
    %c0_10 = arith.constant 0 : index
    %12 = vector.load %arg3[%c0_7, %c0_8, %c0_9, %c0_10] : memref<1x1x16x4xf32, #tpu.memory_space<vmem>>, vector<1x1x16x4xf32>
    %13 = vector.shape_cast %12 : vector<1x1x16x4xf32> to vector<1x16x4xf32>
    %14 = vector.broadcast %1 : vector<1x1x4xf32> to vector<1x16x4xf32>
    %15 = arith.mulf %13, %14 : vector<1x16x4xf32>
    %16 = vector.broadcast %3 : vector<1x1x4xf32> to vector<1x16x4xf32>
    %17 = arith.addf %15, %16 : vector<1x16x4xf32>
    %cst_11 = arith.constant 0.000000e+00 : f32
    %18 = vector.broadcast %cst_11 : f32 to vector<1x16x4xf32>
    %19 = arith.maximumf %17, %18 : vector<1x16x4xf32>
    %c0_i32 = arith.constant 0 : i32
    %20 = arith.cmpi sgt, %arg1, %c0_i32 : i32
    %21 = arith.extui %20 : i1 to i32
    %22 = arith.sitofp %21 : i32 to f32
    %23 = vector.broadcast %22 : f32 to vector<1x16x4xf32>
    %24 = arith.mulf %19, %23 : vector<1x16x4xf32>
    %c0_12 = arith.constant 0 : index
    %c0_13 = arith.constant 0 : index
    %c0_14 = arith.constant 0 : index
    %c0_15 = arith.constant 0 : index
    %25 = vector.load %arg4[%c0_12, %c0_13, %c0_14, %c0_15] : memref<1x1x16x4xf32, #tpu.memory_space<vmem>>, vector<1x1x16x4xf32>
    %26 = vector.shape_cast %25 : vector<1x1x16x4xf32> to vector<1x16x4xf32>
    %27 = vector.broadcast %1 : vector<1x1x4xf32> to vector<1x16x4xf32>
    %28 = arith.mulf %26, %27 : vector<1x16x4xf32>
    %29 = vector.broadcast %3 : vector<1x1x4xf32> to vector<1x16x4xf32>
    %30 = arith.addf %28, %29 : vector<1x16x4xf32>
    %cst_16 = arith.constant 0.000000e+00 : f32
    %31 = vector.broadcast %cst_16 : f32 to vector<1x16x4xf32>
    %32 = arith.maximumf %30, %31 : vector<1x16x4xf32>
    %c1_i32 = arith.constant 1 : i32
    %33 = arith.cmpi slt, %arg1, %c1_i32 : i32
    %34 = arith.extui %33 : i1 to i32
    %35 = arith.sitofp %34 : i32 to f32
    %36 = vector.broadcast %35 : f32 to vector<1x16x4xf32>
    %37 = arith.mulf %32, %36 : vector<1x16x4xf32>
    %38 = tpu.concatenate %24, %11, %37 in 0 : vector<1x16x4xf32>, vector<8x16x4xf32>, vector<1x16x4xf32> -> vector<10x16x4xf32>
    %cst_17 = arith.constant 0.000000e+00 : f32
    %39 = vector.broadcast %cst_17 : f32 to vector<10x1x4xf32>
    %40 = tpu.concatenate %39, %38, %39 in 1 : vector<10x1x4xf32>, vector<10x16x4xf32>, vector<10x1x4xf32> -> vector<10x18x4xf32>
    %41 = vector.extract_strided_slice %40 {offsets = [0, 0, 0], sizes = [8, 16, 4], strides = [1, 1, 1]} : vector<10x18x4xf32> to vector<8x16x4xf32>
    %42 = vector.extract_strided_slice %40 {offsets = [0, 1, 0], sizes = [8, 16, 4], strides = [1, 1, 1]} : vector<10x18x4xf32> to vector<8x16x4xf32>
    %43 = vector.extract_strided_slice %40 {offsets = [0, 2, 0], sizes = [8, 16, 4], strides = [1, 1, 1]} : vector<10x18x4xf32> to vector<8x16x4xf32>
    %44 = tpu.concatenate %41, %42, %43 in 2 : vector<8x16x4xf32>, vector<8x16x4xf32>, vector<8x16x4xf32> -> vector<8x16x12xf32>
    %45 = vector.shape_cast %44 : vector<8x16x12xf32> to vector<128x12xf32>
    %c0_18 = arith.constant 0 : index
    %c0_19 = arith.constant 0 : index
    %c0_20 = arith.constant 0 : index
    %46 = vector.load %arg7[%c0_18, %c0_19, %c0_20] : memref<3x12x4xf32, #tpu.memory_space<vmem>>, vector<1x12x4xf32>
    %47 = vector.shape_cast %46 : vector<1x12x4xf32> to vector<12x4xf32>
    %cst_21 = arith.constant dense<0.000000e+00> : vector<128x4xf32>
    %48 = tpu.matmul %45, %47, %cst_21 {dimension_numbers = #tpu.dot_dimension_numbers<[1], [0], [0], [1], [0, 0, 1, 1], [], []>} : vector<128x12xf32>, vector<12x4xf32>, vector<128x4xf32> -> vector<128x4xf32>
    %49 = vector.extract_strided_slice %40 {offsets = [1, 0, 0], sizes = [8, 16, 4], strides = [1, 1, 1]} : vector<10x18x4xf32> to vector<8x16x4xf32>
    %50 = vector.extract_strided_slice %40 {offsets = [1, 1, 0], sizes = [8, 16, 4], strides = [1, 1, 1]} : vector<10x18x4xf32> to vector<8x16x4xf32>
    %51 = vector.extract_strided_slice %40 {offsets = [1, 2, 0], sizes = [8, 16, 4], strides = [1, 1, 1]} : vector<10x18x4xf32> to vector<8x16x4xf32>
    %52 = tpu.concatenate %49, %50, %51 in 2 : vector<8x16x4xf32>, vector<8x16x4xf32>, vector<8x16x4xf32> -> vector<8x16x12xf32>
    %53 = vector.shape_cast %52 : vector<8x16x12xf32> to vector<128x12xf32>
    %c1 = arith.constant 1 : index
    %c0_22 = arith.constant 0 : index
    %c0_23 = arith.constant 0 : index
    %54 = vector.load %arg7[%c1, %c0_22, %c0_23] : memref<3x12x4xf32, #tpu.memory_space<vmem>>, vector<1x12x4xf32>
    %55 = vector.shape_cast %54 : vector<1x12x4xf32> to vector<12x4xf32>
    %cst_24 = arith.constant dense<0.000000e+00> : vector<128x4xf32>
    %56 = tpu.matmul %53, %55, %cst_24 {dimension_numbers = #tpu.dot_dimension_numbers<[1], [0], [0], [1], [0, 0, 1, 1], [], []>} : vector<128x12xf32>, vector<12x4xf32>, vector<128x4xf32> -> vector<128x4xf32>
    %57 = arith.addf %48, %56 : vector<128x4xf32>
    %58 = vector.extract_strided_slice %40 {offsets = [2, 0, 0], sizes = [8, 16, 4], strides = [1, 1, 1]} : vector<10x18x4xf32> to vector<8x16x4xf32>
    %59 = vector.extract_strided_slice %40 {offsets = [2, 1, 0], sizes = [8, 16, 4], strides = [1, 1, 1]} : vector<10x18x4xf32> to vector<8x16x4xf32>
    %60 = vector.extract_strided_slice %40 {offsets = [2, 2, 0], sizes = [8, 16, 4], strides = [1, 1, 1]} : vector<10x18x4xf32> to vector<8x16x4xf32>
    %61 = tpu.concatenate %58, %59, %60 in 2 : vector<8x16x4xf32>, vector<8x16x4xf32>, vector<8x16x4xf32> -> vector<8x16x12xf32>
    %62 = vector.shape_cast %61 : vector<8x16x12xf32> to vector<128x12xf32>
    %c2 = arith.constant 2 : index
    %c0_25 = arith.constant 0 : index
    %c0_26 = arith.constant 0 : index
    %63 = vector.load %arg7[%c2, %c0_25, %c0_26] : memref<3x12x4xf32, #tpu.memory_space<vmem>>, vector<1x12x4xf32>
    %64 = vector.shape_cast %63 : vector<1x12x4xf32> to vector<12x4xf32>
    %cst_27 = arith.constant dense<0.000000e+00> : vector<128x4xf32>
    %65 = tpu.matmul %62, %64, %cst_27 {dimension_numbers = #tpu.dot_dimension_numbers<[1], [0], [0], [1], [0, 0, 1, 1], [], []>} : vector<128x12xf32>, vector<12x4xf32>, vector<128x4xf32> -> vector<128x4xf32>
    %66 = arith.addf %57, %65 : vector<128x4xf32>
    %cst_28 = arith.constant dense<0.000000e+00> : vector<4xf32>
    %67 = vector.multi_reduction <add>, %66, %cst_28 [0] : vector<128x4xf32> to vector<4xf32>
    %68 = vector.shape_cast %67 : vector<4xf32> to vector<1x4xf32>
    %69 = arith.mulf %66, %66 : vector<128x4xf32>
    %cst_29 = arith.constant dense<0.000000e+00> : vector<4xf32>
    %70 = vector.multi_reduction <add>, %69, %cst_29 [0] : vector<128x4xf32> to vector<4xf32>
    %71 = vector.shape_cast %70 : vector<4xf32> to vector<1x4xf32>
    %72 = tpu.concatenate %68, %71 in 0 : vector<1x4xf32>, vector<1x4xf32> -> vector<2x4xf32>
    %73 = vector.shape_cast %72 : vector<2x4xf32> to vector<1x1x2x4xf32>
    %c0_30 = arith.constant 0 : index
    %c0_31 = arith.constant 0 : index
    %c0_32 = arith.constant 0 : index
    %c0_33 = arith.constant 0 : index
    %74 = vector.load %arg9[%c0_30, %c0_31, %c0_32, %c0_33] : memref<1x1x2x4xf32, #tpu.memory_space<vmem>>, vector<1x1x2x4xf32>
    tpu.vector_store %arg9[%c0_30, %c0_31, %c0_32, %c0_33], %73 {strides = array<i32>} : memref<1x1x2x4xf32, #tpu.memory_space<vmem>>, vector<1x1x2x4xf32>,
    %75 = vector.shape_cast %66 : vector<128x4xf32> to vector<8x16x4xf32>
    %c0_34 = arith.constant 0 : index
    %c0_35 = arith.constant 0 : index
    %c0_36 = arith.constant 0 : index
    %c0_37 = arith.constant 0 : index
    %76 = vector.load %arg8[%c0_34, %c0_35, %c0_36, %c0_37] : memref<1x8x16x4xf32, #tpu.memory_space<vmem>>, vector<1x8x16x4xf32>
    %77 = vector.shape_cast %76 : vector<1x8x16x4xf32> to vector<8x16x4xf32>
    %78 = vector.shape_cast %75 : vector<8x16x4xf32> to vector<1x8x16x4xf32>
    tpu.vector_store %arg8[%c0_34, %c0_35, %c0_36, %c0_37], %78 {strides = array<i32>} : memref<1x8x16x4xf32, #tpu.memory_space<vmem>>, vector<1x8x16x4xf32>,
    return
  }
  func.func @transform_0(%arg0: i32, %arg1: i32) -> (i32, i32, i32, i32) {
    %c0_i32 = arith.constant 0 : i32
    %c0_i32_0 = arith.constant 0 : i32
    %c0_i32_1 = arith.constant 0 : i32
    return %arg0, %arg1, %c0_i32, %c0_i32_0 : i32, i32, i32, i32
  }
  func.func @transform_1(%arg0: i32, %arg1: i32) -> (i32, i32, i32, i32) {
    %c8_i32 = arith.constant 8 : i32
    %0 = arith.muli %arg1, %c8_i32 : i32
    %c1_i32 = arith.constant 1 : i32
    %1 = arith.subi %0, %c1_i32 : i32
    %c0_i32 = arith.constant 0 : i32
    %2 = arith.maxsi %1, %c0_i32 : i32
    %c0_i32_0 = arith.constant 0 : i32
    %c0_i32_1 = arith.constant 0 : i32
    %c0_i32_2 = arith.constant 0 : i32
    return %arg0, %2, %c0_i32_0, %c0_i32_1 : i32, i32, i32, i32
  }
  func.func @transform_2(%arg0: i32, %arg1: i32) -> (i32, i32, i32, i32) {
    %c1_i32 = arith.constant 1 : i32
    %0 = arith.addi %arg1, %c1_i32 : i32
    %c8_i32 = arith.constant 8 : i32
    %1 = arith.muli %0, %c8_i32 : i32
    %c15_i32 = arith.constant 15 : i32
    %2 = arith.minsi %1, %c15_i32 : i32
    %c0_i32 = arith.constant 0 : i32
    %c0_i32_0 = arith.constant 0 : i32
    %c0_i32_1 = arith.constant 0 : i32
    return %arg0, %2, %c0_i32, %c0_i32_0 : i32, i32, i32, i32
  }
  func.func @transform_3(%arg0: i32, %arg1: i32) -> (i32, i32) {
    %c0_i32 = arith.constant 0 : i32
    %c0_i32_0 = arith.constant 0 : i32
    %c0_i32_1 = arith.constant 0 : i32
    return %c0_i32, %c0_i32_0 : i32, i32
  }
  func.func @transform_4(%arg0: i32, %arg1: i32) -> (i32, i32) {
    %c0_i32 = arith.constant 0 : i32
    %c0_i32_0 = arith.constant 0 : i32
    %c0_i32_1 = arith.constant 0 : i32
    return %c0_i32, %c0_i32_0 : i32, i32
  }
  func.func @transform_5(%arg0: i32, %arg1: i32) -> (i32, i32, i32) {
    %c0_i32 = arith.constant 0 : i32
    %c0_i32_0 = arith.constant 0 : i32
    %c0_i32_1 = arith.constant 0 : i32
    %c0_i32_2 = arith.constant 0 : i32
    return %c0_i32, %c0_i32_0, %c0_i32_1 : i32, i32, i32
  }
  func.func @transform_6(%arg0: i32, %arg1: i32) -> (i32, i32, i32, i32) {
    %c0_i32 = arith.constant 0 : i32
    %c0_i32_0 = arith.constant 0 : i32
    %c0_i32_1 = arith.constant 0 : i32
    return %arg0, %arg1, %c0_i32, %c0_i32_0 : i32, i32, i32, i32
  }
  func.func @transform_7(%arg0: i32, %arg1: i32) -> (i32, i32, i32, i32) {
    %c0_i32 = arith.constant 0 : i32
    %c0_i32_0 = arith.constant 0 : i32
    %c0_i32_1 = arith.constant 0 : i32
    return %arg0, %arg1, %c0_i32, %c0_i32_0 : i32, i32, i32, i32
  }
}

</mosaic_0001>

<llo_original>
// kernel: tpu_custom_call.1
$region0: #{tpu_custom_call.1}
  #allocation0 [shape = 'u32[]', space=smem, size = 0x4, offset = 0x4, fixed_abs, tag = 'smem constant byte address 0x4 - core index']
  #allocation1 [shape = 'u32[144,128]{1,0:T(1,128)}', space=vmem, size = 0x12000, scoped, tag = 'internal scratch']
  %s0 = inlined_call_operand.vmem [shape: f32[2,16,16,4], index: 0, kind: input, shape index: {}]
  %s1 = inlined_call_operand.vmem [shape: f32[2,16,16,4], index: 1, kind: input, shape index: {}]
  %s2 = inlined_call_operand.vmem [shape: f32[2,16,16,4], index: 2, kind: input, shape index: {}]
  %s3 = inlined_call_operand.vmem [shape: f32[1,4], index: 3, kind: input, shape index: {}]
  %s4 = inlined_call_operand.vmem [shape: f32[1,4], index: 4, kind: input, shape index: {}]
  %s5 = inlined_call_operand.vmem [shape: f32[3,12,4], index: 5, kind: input, shape index: {}]
  %s6 = inlined_call_operand.vmem [shape: f32[2,16,16,4], index: 6, kind: output, shape index: {0}]
  %s7 = inlined_call_operand.hbm [shape: f32[2,2,2,4], index: 7, kind: output, shape index: {1}]
  %8 = xla_tuple %s6, %s7
  %s9 = sld [smem:[#allocation0]]
  $region65: #{tpu_custom_call.1} parent=0
    _
  %s11 = ssub.s32 1, %s9
  %s12 = scalar_select 0, %s11, %s9
  $region1: #{tpu_custom_call.1} parent=0
    #allocation2 [shape = 'u8[2048]{0}', space=vmem, size = 0x800, scoped, tag = 'output window, operand 1']
    #allocation3 [shape = 's32[2]{0}', space=sflag, size = 0x8, scoped, tag = 'scoped memory for tpu_custom_call.1']
    %13 = vsyncpa [#allocation3], 0
    %s14 = scalar_lea.sflag [#allocation3], 1
    %15 = vsyncpa %s14, 0
    loop: start=0, step=1, limit=6
    $region2: #{tpu_custom_call.1} parent=1 // loop_pre_header
      _
    $region3: #{tpu_custom_call.1} parent=1 // loop_header
      %s17 = sphi 0, %s21
      %p18 = scmp.ge.s32.totalorder %s17, 6
      %s24 = sphi 0, %s36
      %s25 = sphi 0, %s32
      %s26 = sphi 0, %s24
      %s27 = sphi 0, %s25
      %s28 = sphi 0, %s26
      %s29 = sphi 0, %s27
      %s41 = sphi 0, %s43
      %s44 = sphi 0, %s41
      %s45 = sphi 0, %s44
      %s61 = sphi 0, %s45
      %s77 = sphi 0, %s79
      %s80 = sphi 0, %s77
      %s81 = sphi 0, %s80
      %s97 = sphi 0, %s81
      %s113 = sphi 0, %s115
      %s116 = sphi 0, %s113
      %s117 = sphi 0, %s116
      %s133 = sphi 0, %s117
      %s137 = sphi 0, %s137
      %s139 = sphi 0, %s137
      %s140 = sphi 0, %s139
      %s154 = sphi 0, %s140
      %s158 = sphi 0, %s158
      %s160 = sphi 0, %s158
      %s161 = sphi 0, %s160
      %s175 = sphi 0, %s161
      %s179 = sphi 0, %s179
      %s181 = sphi 0, %s179
      %s182 = sphi 0, %s181
      %s196 = sphi 0, %s182
      %s204 = sphi 0, %s206
      %s207 = sphi 0, %s204
      %s208 = sphi 0, %s207
      %s224 = sphi 0, %s208
      %s232 = sphi 0, %s234
      %s235 = sphi 0, %s232
      %s236 = sphi 0, %s235
      %s252 = sphi 0, %s236
    $region4: #{tpu_custom_call.1} parent=1 // loop_header_branch
      %20 = sbr.rel (%p18) target = $region8
    $region5: #{tpu_custom_call.1} parent=1 // loop_body
      %s22 = ssub.s32 %s17, 1
      %s23 = ssub.s32 %s17, 2
      %s30 = sadd.s32 1, %s25
      %p31 = scmp.ge.s32.totalorder %s30, 2
      %s32 = scalar_select %p31, 0, %s30
      %s33 = sadd.s32 1, %s24
      %s34 = scalar_select %p31, %s33, %s24
      %p35 = scmp.ge.s32.totalorder %s34, 2
      %s36 = scalar_select %p35, 0, %s34
      %s37 = ssub.s32 %s24, %s36
      %s38 = ssub.s32 %s25, %s32
      %s39 = sor.u32 %s37, %s38
      %p40 = scmp.eq.s32.totalorder %s39, 0
      %s42 = sadd.s32 %s41, 1
      %s43 = scalar_select %p40, %s41, %s42
      %p46 = pneg %p40
      %p47 = scmp.eq.s32.totalorder %s17, 3
      %p48 = por %p46, %p47
      %p49 = scmp.ne.s32.totalorder %s41, %s44
      %p50 = scmp.eq.s32.totalorder %s17, 0
      %p51 = por %p49, %p50
      %p52 = scmp.ne.s32.totalorder %s41, %s44
      %p53 = scmp.eq.s32.totalorder %s22, 3
      %p54 = por %p52, %p53
      %p55 = scmp.ne.s32.totalorder %s44, %s45
      %p56 = scmp.eq.s32.totalorder %s22, 0
      %p57 = por %p55, %p56
      %p58 = scmp.ne.s32.totalorder %s44, %s45
      %p59 = scmp.eq.s32.totalorder %s23, 3
      %p60 = por %p58, %p59
      %p62 = scmp.ne.s32.totalorder %s45, %s61
      %p63 = scmp.eq.s32.totalorder %s23, 0
      %p64 = por %p62, %p63
      %s65 = smul.u32 %s25, 8
      %s66 = ssub.s32 %s65, 1
      %p67 = scmp.gt.s32.totalorder %s66, 0
      %s68 = scalar_select %p67, %s66, 0
      %s69 = smul.u32 %s32, 8
      %s70 = ssub.s32 %s69, 1
      %p71 = scmp.gt.s32.totalorder %s70, 0
      %s72 = scalar_select %p71, %s70, 0
      %s73 = ssub.s32 %s24, %s36
      %s74 = ssub.s32 %s68, %s72
      %s75 = sor.u32 %s73, %s74
      %p76 = scmp.eq.s32.totalorder %s75, 0
      %s78 = sadd.s32 %s77, 1
      %s79 = scalar_select %p76, %s77, %s78
      %p82 = pneg %p76
      %p83 = scmp.eq.s32.totalorder %s17, 3
      %p84 = por %p82, %p83
      %p85 = scmp.ne.s32.totalorder %s77, %s80
      %p86 = scmp.eq.s32.totalorder %s17, 0
      %p87 = por %p85, %p86
      %p88 = scmp.ne.s32.totalorder %s77, %s80
      %p89 = scmp.eq.s32.totalorder %s22, 3
      %p90 = por %p88, %p89
      %p91 = scmp.ne.s32.totalorder %s80, %s81
      %p92 = scmp.eq.s32.totalorder %s22, 0
      %p93 = por %p91, %p92
      %p94 = scmp.ne.s32.totalorder %s80, %s81
      %p95 = scmp.eq.s32.totalorder %s23, 3
      %p96 = por %p94, %p95
      %p98 = scmp.ne.s32.totalorder %s81, %s97
      %p99 = scmp.eq.s32.totalorder %s23, 0
      %p100 = por %p98, %p99
      %s101 = sadd.s32 %s25, 1
      %s102 = smul.u32 %s101, 8
      %p103 = scmp.lt.s32.totalorder %s102, 15
      %s104 = scalar_select %p103, %s102, 15
      %s105 = sadd.s32 %s32, 1
      %s106 = smul.u32 %s105, 8
      %p107 = scmp.lt.s32.totalorder %s106, 15
      %s108 = scalar_select %p107, %s106, 15
      %s109 = ssub.s32 %s24, %s36
      %s110 = ssub.s32 %s104, %s108
      %s111 = sor.u32 %s109, %s110
      %p112 = scmp.eq.s32.totalorder %s111, 0
      %s114 = sadd.s32 %s113, 1
      %s115 = scalar_select %p112, %s113, %s114
      %p118 = pneg %p112
      %p119 = scmp.eq.s32.totalorder %s17, 3
      %p120 = por %p118, %p119
      %p121 = scmp.ne.s32.totalorder %s113, %s116
      %p122 = scmp.eq.s32.totalorder %s17, 0
      %p123 = por %p121, %p122
      %p124 = scmp.ne.s32.totalorder %s113, %s116
      %p125 = scmp.eq.s32.totalorder %s22, 3
      %p126 = por %p124, %p125
      %p127 = scmp.ne.s32.totalorder %s116, %s117
      %p128 = scmp.eq.s32.totalorder %s22, 0
      %p129 = por %p127, %p128
      %p130 = scmp.ne.s32.totalorder %s116, %s117
      %p131 = scmp.eq.s32.totalorder %s23, 3
      %p132 = por %p130, %p131
      %p134 = scmp.ne.s32.totalorder %s117, %s133
      %p135 = scmp.eq.s32.totalorder %s23, 0
      %p136 = por %p134, %p135
      %s138 = sadd.s32 %s137, 1
      %p141 = scmp.eq.s32.totalorder %s17, 3
      %p142 = scmp.ne.s32.totalorder %s137, %s139
      %p143 = scmp.eq.s32.totalorder %s17, 0
      %p144 = por %p142, %p143
      %p145 = scmp.ne.s32.totalorder %s137, %s139
      %p146 = scmp.eq.s32.totalorder %s22, 3
      %p147 = por %p145, %p146
      %p148 = scmp.ne.s32.totalorder %s139, %s140
      %p149 = scmp.eq.s32.totalorder %s22, 0
      %p150 = por %p148, %p149
      %p151 = scmp.ne.s32.totalorder %s139, %s140
      %p152 = scmp.eq.s32.totalorder %s23, 3
      %p153 = por %p151, %p152
      %p155 = scmp.ne.s32.totalorder %s140, %s154
      %p156 = scmp.eq.s32.totalorder %s23, 0
      %p157 = por %p155, %p156
      %s159 = sadd.s32 %s158, 1
      %p162 = scmp.eq.s32.totalorder %s17, 3
      %p163 = scmp.ne.s32.totalorder %s158, %s160
      %p164 = scmp.eq.s32.totalorder %s17, 0
      %p165 = por %p163, %p164
      %p166 = scmp.ne.s32.totalorder %s158, %s160
      %p167 = scmp.eq.s32.totalorder %s22, 3
      %p168 = por %p166, %p167
      %p169 = scmp.ne.s32.totalorder %s160, %s161
      %p170 = scmp.eq.s32.totalorder %s22, 0
      %p171 = por %p169, %p170
      %p172 = scmp.ne.s32.totalorder %s160, %s161
      %p173 = scmp.eq.s32.totalorder %s23, 3
      %p174 = por %p172, %p173
      %p176 = scmp.ne.s32.totalorder %s161, %s175
      %p177 = scmp.eq.s32.totalorder %s23, 0
      %p178 = por %p176, %p177
      %s180 = sadd.s32 %s179, 1
      %p183 = scmp.eq.s32.totalorder %s17, 3
      %p184 = scmp.ne.s32.totalorder %s179, %s181
      %p185 = scmp.eq.s32.totalorder %s17, 0
      %p186 = por %p184, %p185
      %p187 = scmp.ne.s32.totalorder %s179, %s181
      %p188 = scmp.eq.s32.totalorder %s22, 3
      %p189 = por %p187, %p188
      %p190 = scmp.ne.s32.totalorder %s181, %s182
      %p191 = scmp.eq.s32.totalorder %s22, 0
      %p192 = por %p190, %p191
      %p193 = scmp.ne.s32.totalorder %s181, %s182
      %p194 = scmp.eq.s32.totalorder %s23, 3
      %p195 = por %p193, %p194
      %p197 = scmp.ne.s32.totalorder %s182, %s196
      %p198 = scmp.eq.s32.totalorder %s23, 0
      %p199 = por %p197, %p198
      %s200 = ssub.s32 %s24, %s36
      %s201 = ssub.s32 %s25, %s32
      %s202 = sor.u32 %s200, %s201
      %p203 = scmp.eq.s32.totalorder %s202, 0
      %s205 = sadd.s32 %s204, 1
      %s206 = scalar_select %p203, %s204, %s205
      %p209 = pneg %p203
      %p210 = scmp.eq.s32.totalorder %s17, 3
      %p211 = por %p209, %p210
      %p212 = scmp.ne.s32.totalorder %s204, %s207
      %p213 = scmp.eq.s32.totalorder %s17, 0
      %p214 = por %p212, %p213
      %p215 = scmp.ne.s32.totalorder %s204, %s207
      %p216 = scmp.eq.s32.totalorder %s22, 3
      %p217 = por %p215, %p216
      %p218 = scmp.ne.s32.totalorder %s207, %s208
      %p219 = scmp.eq.s32.totalorder %s22, 0
      %p220 = por %p218, %p219
      %p221 = scmp.ne.s32.totalorder %s207, %s208
      %p222 = scmp.eq.s32.totalorder %s23, 3
      %p223 = por %p221, %p222
      %p225 = scmp.ne.s32.totalorder %s208, %s224
      %p226 = scmp.eq.s32.totalorder %s23, 0
      %p227 = por %p225, %p226
      %s228 = ssub.s32 %s24, %s36
      %s229 = ssub.s32 %s25, %s32
      %s230 = sor.u32 %s228, %s229
      %p231 = scmp.eq.s32.totalorder %s230, 0
      %s233 = sadd.s32 %s232, 1
      %s234 = scalar_select %p231, %s232, %s233
      %p237 = pneg %p231
      %p238 = scmp.eq.s32.totalorder %s17, 3
      %p239 = por %p237, %p238
      %p240 = scmp.ne.s32.totalorder %s232, %s235
      %p241 = scmp.eq.s32.totalorder %s17, 0
      %p242 = por %p240, %p241
      %p243 = scmp.ne.s32.totalorder %s232, %s235
      %p244 = scmp.eq.s32.totalorder %s22, 3
      %p245 = por %p243, %p244
      %p246 = scmp.ne.s32.totalorder %s235, %s236
      %p247 = scmp.eq.s32.totalorder %s22, 0
      %p248 = por %p246, %p247
      %p249 = scmp.ne.s32.totalorder %s235, %s236
      %p250 = scmp.eq.s32.totalorder %s23, 3
      %p251 = por %p249, %p250
      %p253 = scmp.ne.s32.totalorder %s236, %s252
      %p254 = scmp.eq.s32.totalorder %s23, 0
      %p255 = por %p253, %p254
      %p256 = scmp.le.s32.totalorder 1, %s17
      %p257 = scmp.lt.s32.totalorder %s17, 5
      %p258 = pnand %p256, %p257
      %p259 = pneg %p258
      // Predicated region
      $region9: #{tpu_custom_call.1} parent=5 // pred_check
        _
      $region10: #{tpu_custom_call.1} parent=5 // pred_check_branch
        %261 = sbr.rel (%p258) target = $region12
      $region11: #{tpu_custom_call.1} parent=5 // pred_region
        %s262 = ssub.s32 %s17, 1
        // Predicated region
        $region13: #{tpu_custom_call.1} parent=11 // pred_check
          %p263 = pneg %p150
        $region14: #{tpu_custom_call.1} parent=11 // pred_check_branch
          %265 = sbr.rel (%p263) target = $region16
        $region15: #{tpu_custom_call.1} parent=11 // pred_region
          _
        $region16: #{tpu_custom_call.1} parent=11 // pred_fallthru
          _
        // Predicated region
        $region17: #{tpu_custom_call.1} parent=11 // pred_check
          %p266 = pneg %p171
        $region18: #{tpu_custom_call.1} parent=11 // pred_check_branch
          %268 = sbr.rel (%p266) target = $region20
        $region19: #{tpu_custom_call.1} parent=11 // pred_region
          _
        $region20: #{tpu_custom_call.1} parent=11 // pred_fallthru
          _
        // Predicated region
        $region21: #{tpu_custom_call.1} parent=11 // pred_check
          %p269 = pneg %p192
        $region22: #{tpu_custom_call.1} parent=11 // pred_check_branch
          %271 = sbr.rel (%p269) target = $region24
        $region23: #{tpu_custom_call.1} parent=11 // pred_region
          _
        $region24: #{tpu_custom_call.1} parent=11 // pred_fallthru
          _
      $region12: #{tpu_custom_call.1} parent=5 // pred_fallthru
        _
      %p272 = scmp.lt.s32.totalorder %s17, 4
      // Predicated region
      $region25: #{tpu_custom_call.1} parent=5 // pred_check
        %p273 = pneg %p272
      $region26: #{tpu_custom_call.1} parent=5 // pred_check_branch
        %275 = sbr.rel (%p273) target = $region28
      $region27: #{tpu_custom_call.1} parent=5 // pred_region
        // Predicated region
        $region29: #{tpu_custom_call.1} parent=27 // pred_check
          %p276 = pneg %p51
        $region30: #{tpu_custom_call.1} parent=27 // pred_check_branch
          %278 = sbr.rel (%p276) target = $region32
        $region31: #{tpu_custom_call.1} parent=27 // pred_region
          %s279 = smul.u32 8, %s25
          %p280 = scmp.lt.s32.totalorder %s24, 1
          %s281 = scalar_select %p280, %s24, 1
          %p282 = scmp.lt.s32.totalorder %s279, 15
          %s283 = scalar_select %p282, %s279, 15
          %s284 = smul.addr %s283, 2
          %s285 = smul.addr %s281, 32
          %s286 = sadd.s32 %s284, %s285
          %s287 = smul.addr %s286, 8
          %s288 = scalar_lea.vmem %s0, %s287
          %s289 = smul.u32 8, %s25
        $region32: #{tpu_custom_call.1} parent=27 // pred_fallthru
          _
        // Predicated region
        $region33: #{tpu_custom_call.1} parent=27 // pred_check
          %p290 = pneg %p87
        $region34: #{tpu_custom_call.1} parent=27 // pred_check_branch
          %292 = sbr.rel (%p290) target = $region36
        $region35: #{tpu_custom_call.1} parent=27 // pred_region
          %s293 = smul.u32 %s25, 8
          %s294 = ssub.s32 %s293, 1
          %p295 = scmp.gt.s32.totalorder %s294, 0
          %s296 = scalar_select %p295, %s294, 0
          %p297 = scmp.lt.s32.totalorder %s24, 1
          %s298 = scalar_select %p297, %s24, 1
          %p299 = scmp.lt.s32.totalorder %s296, 15
          %s300 = scalar_select %p299, %s296, 15
          %s301 = smul.addr %s300, 2
          %s302 = smul.addr %s298, 32
          %s303 = sadd.s32 %s301, %s302
          %s304 = smul.addr %s303, 8
          %s305 = scalar_lea.vmem %s1, %s304
          %s306 = smul.u32 %s25, 8
          %s307 = ssub.s32 %s306, 1
          %p308 = scmp.gt.s32.totalorder %s307, 0
          %s309 = scalar_select %p308, %s307, 0
        $region36: #{tpu_custom_call.1} parent=27 // pred_fallthru
          _
        // Predicated region
        $region37: #{tpu_custom_call.1} parent=27 // pred_check
          %p310 = pneg %p123
        $region38: #{tpu_custom_call.1} parent=27 // pred_check_branch
          %312 = sbr.rel (%p310) target = $region40
        $region39: #{tpu_custom_call.1} parent=27 // pred_region
          %s313 = sadd.s32 %s25, 1
          %s314 = smul.u32 %s313, 8
          %p315 = scmp.lt.s32.totalorder %s314, 15
          %s316 = scalar_select %p315, %s314, 15
          %p317 = scmp.lt.s32.totalorder %s24, 1
          %s318 = scalar_select %p317, %s24, 1
          %p319 = scmp.lt.s32.totalorder %s316, 15
          %s320 = scalar_select %p319, %s316, 15
          %s321 = smul.addr %s320, 2
          %s322 = smul.addr %s318, 32
          %s323 = sadd.s32 %s321, %s322
          %s324 = smul.addr %s323, 8
          %s325 = scalar_lea.vmem %s2, %s324
          %s326 = sadd.s32 %s25, 1
          %s327 = smul.u32 %s326, 8
          %p328 = scmp.lt.s32.totalorder %s327, 15
          %s329 = scalar_select %p328, %s327, 15
        $region40: #{tpu_custom_call.1} parent=27 // pred_fallthru
          _
      $region28: #{tpu_custom_call.1} parent=5 // pred_fallthru
        _
      %p330 = scmp.le.s32.totalorder 1, %s17
      %p331 = scmp.lt.s32.totalorder %s17, 5
      %p332 = pnand %p330, %p331
      %p333 = pneg %p332
      // Predicated region
      $region41: #{tpu_custom_call.1} parent=5 // pred_check
        _
      $region42: #{tpu_custom_call.1} parent=5 // pred_check_branch
        %335 = sbr.rel (%p332) target = $region44
      $region43: #{tpu_custom_call.1} parent=5 // pred_region
        %s336 = ssub.s32 %s17, 1
        %s337 = smul.u32 8, %s27
        %p338 = scmp.lt.s32.totalorder %s26, 1
        %s339 = scalar_select %p338, %s26, 1
        %p340 = scmp.lt.s32.totalorder %s337, 15
        %s341 = scalar_select %p340, %s337, 15
        %s342 = smul.addr %s341, 2
        %s343 = smul.addr %s339, 32
        %s344 = sadd.s32 %s342, %s343
        %s345 = smul.addr %s344, 8
        %s346 = scalar_lea.vmem %s0, %s345
        %p347 = pneg %p57
        %p348 = pneg %p54
        %s349 = smul.u32 %s27, 8
        %s350 = ssub.s32 %s349, 1
        %p351 = scmp.gt.s32.totalorder %s350, 0
        %s352 = scalar_select %p351, %s350, 0
        %p353 = scmp.lt.s32.totalorder %s26, 1
        %s354 = scalar_select %p353, %s26, 1
        %p355 = scmp.lt.s32.totalorder %s352, 15
        %s356 = scalar_select %p355, %s352, 15
        %s357 = smul.addr %s356, 2
        %s358 = smul.addr %s354, 32
        %s359 = sadd.s32 %s357, %s358
        %s360 = smul.addr %s359, 8
        %s361 = scalar_lea.vmem %s1, %s360
        %p362 = pneg %p93
        %p363 = pneg %p90
        %s364 = sadd.s32 %s27, 1
        %s365 = smul.u32 %s364, 8
        %p366 = scmp.lt.s32.totalorder %s365, 15
        %s367 = scalar_select %p366, %s365, 15
        %p368 = scmp.lt.s32.totalorder %s26, 1
        %s369 = scalar_select %p368, %s26, 1
        %p370 = scmp.lt.s32.totalorder %s367, 15
        %s371 = scalar_select %p370, %s367, 15
        %s372 = smul.addr %s371, 2
        %s373 = smul.addr %s369, 32
        %s374 = sadd.s32 %s372, %s373
        %s375 = smul.addr %s374, 8
        %s376 = scalar_lea.vmem %s2, %s375
        %p377 = pneg %p129
        %p378 = pneg %p126
        %p379 = pneg %p150
        %p380 = pneg %p147
        %p381 = pneg %p171
        %p382 = pneg %p168
        %p383 = pneg %p192
        %p384 = pneg %p189
        %p385 = pneg %p220
        %p386 = pneg %p217
        %s387 = smul.u32 8, %s27
        %p388 = scmp.lt.s32.totalorder %s26, 1
        %s389 = scalar_select %p388, %s26, 1
        %p390 = scmp.lt.s32.totalorder %s387, 15
        %s391 = scalar_select %p390, %s387, 15
        %s392 = smul.addr %s391, 2
        %s393 = smul.addr %s389, 32
        %s394 = sadd.s32 %s392, %s393
        %s395 = smul.addr %s394, 8
        %s396 = scalar_lea.vmem %s6, %s395
        %p397 = pneg %p248
        %p398 = pneg %p245
        %s399 = sand.u32 %s235, 1
        %s400 = scalar_lea.sflag [#allocation3], %s399
        %s401 = sand.u32 %s235, 1
        %s402 = smul.addr %s401, 2
        %s403 = scalar_lea.vmem [#allocation2], %s402
        %s404 = smul.u32 8, %s27
        %p405 = scmp.lt.s32.totalorder %s26, 1
        %s406 = scalar_select %p405, %s26, 1
        %p407 = scmp.lt.s32.totalorder %s404, 15
        %s408 = scalar_select %p407, %s404, 15
        %s409 = smul.addr %s408, 2
        %s410 = smul.addr %s406, 32
        %s411 = sadd.s32 %s409, %s410
        %s412 = smul.addr %s411, 8
        %s413 = scalar_lea.vmem %s0, %s412
        %s414 = smul.u32 8, %s27
        %s415 = smul.u32 %s27, 8
        %s416 = ssub.s32 %s415, 1
        %p417 = scmp.gt.s32.totalorder %s416, 0
        %s418 = scalar_select %p417, %s416, 0
        %p419 = scmp.lt.s32.totalorder %s26, 1
        %s420 = scalar_select %p419, %s26, 1
        %p421 = scmp.lt.s32.totalorder %s418, 15
        %s422 = scalar_select %p421, %s418, 15
        %s423 = smul.addr %s422, 2
        %s424 = smul.addr %s420, 32
        %s425 = sadd.s32 %s423, %s424
        %s426 = smul.addr %s425, 8
        %s427 = scalar_lea.vmem %s1, %s426
        %s428 = smul.u32 %s27, 8
        %s429 = ssub.s32 %s428, 1
        %p430 = scmp.gt.s32.totalorder %s429, 0
        %s431 = scalar_select %p430, %s429, 0
        %s432 = sadd.s32 %s27, 1
        %s433 = smul.u32 %s432, 8
        %p434 = scmp.lt.s32.totalorder %s433, 15
        %s435 = scalar_select %p434, %s433, 15
        %p436 = scmp.lt.s32.totalorder %s26, 1
        %s437 = scalar_select %p436, %s26, 1
        %p438 = scmp.lt.s32.totalorder %s435, 15
        %s439 = scalar_select %p438, %s435, 15
        %s440 = smul.addr %s439, 2
        %s441 = smul.addr %s437, 32
        %s442 = sadd.s32 %s440, %s441
        %s443 = smul.addr %s442, 8
        %s444 = scalar_lea.vmem %s2, %s443
        %s445 = sadd.s32 %s27, 1
        %s446 = smul.u32 %s445, 8
        %p447 = scmp.lt.s32.totalorder %s446, 15
        %s448 = scalar_select %p447, %s446, 15
        %s449 = smul.u32 8, %s27
        %p450 = scmp.lt.s32.totalorder %s26, 1
        %s451 = scalar_select %p450, %s26, 1
        %p452 = scmp.lt.s32.totalorder %s449, 15
        %s453 = scalar_select %p452, %s449, 15
        %s454 = smul.addr %s453, 2
        %s455 = smul.addr %s451, 32
        %s456 = sadd.s32 %s454, %s455
        %s457 = smul.addr %s456, 8
        %s458 = scalar_lea.vmem %s6, %s457
        %s459 = smul.u32 8, %s27
        %v460 = vld [vmem:[%s3] sm:$0x1]
        %v461 = vld [vmem:[%s4] sm:$0x1]
        %v462 = vld [vmem:[%s413] sm:$0xff]
        %v463 = vld [vmem:[%s413 + $0x8] sm:$0xff]
        %v464 = vld [vmem:[%s413 + $0x10] sm:$0xff]
        %v465 = vld [vmem:[%s413 + $0x18] sm:$0xff]
        %v466 = vld [vmem:[%s413 + $0x20] sm:$0xff]
        %v467 = vld [vmem:[%s413 + $0x28] sm:$0xff]
        %v468 = vld [vmem:[%s413 + $0x30] sm:$0xff]
        %v469 = vld [vmem:[%s413 + $0x38] sm:$0xff]
        %v470 = vld [vmem:[%s413 + $0x40] sm:$0xff]
        %v471 = vld [vmem:[%s413 + $0x48] sm:$0xff]
        %v472 = vld [vmem:[%s413 + $0x50] sm:$0xff]
        %v473 = vld [vmem:[%s413 + $0x58] sm:$0xff]
        %v474 = vld [vmem:[%s413 + $0x60] sm:$0xff]
        %v475 = vld [vmem:[%s413 + $0x68] sm:$0xff]
        %v476 = vld [vmem:[%s413 + $0x70] sm:$0xff]
        %v477 = vld [vmem:[%s413 + $0x78] sm:$0xff]
        %v479 = vlaneseq
        %v480 = vshrl.u32 %v479, 7
        %v481 = vsub.s32 0, %v480
        %v482 = vrot.slane %v460, %v481
        %v484 = vmul.f32 %v462, %v482
        %v485 = vmul.f32 %v463, %v482
        %v486 = vmul.f32 %v464, %v482
        %v487 = vmul.f32 %v465, %v482
        %v488 = vmul.f32 %v466, %v482
        %v489 = vmul.f32 %v467, %v482
        %v490 = vmul.f32 %v468, %v482
        %v491 = vmul.f32 %v469, %v482
        %v492 = vmul.f32 %v470, %v482
        %v493 = vmul.f32 %v471, %v482
        %v494 = vmul.f32 %v472, %v482
        %v495 = vmul.f32 %v473, %v482
        %v496 = vmul.f32 %v474, %v482
        %v497 = vmul.f32 %v475, %v482
        %v498 = vmul.f32 %v476, %v482
        %v499 = vmul.f32 %v477, %v482
        %v501 = vlaneseq
        %v502 = vshrl.u32 %v501, 7
        %v503 = vsub.s32 0, %v502
        %v504 = vrot.slane %v461, %v503
        %v506 = vadd.f32 %v484, %v504
        %v507 = vadd.f32 %v485, %v504
        %v508 = vadd.f32 %v486, %v504
        %v509 = vadd.f32 %v487, %v504
        %v510 = vadd.f32 %v488, %v504
        %v511 = vadd.f32 %v489, %v504
        %v512 = vadd.f32 %v490, %v504
        %v513 = vadd.f32 %v491, %v504
        %v514 = vadd.f32 %v492, %v504
        %v515 = vadd.f32 %v493, %v504
        %v516 = vadd.f32 %v494, %v504
        %v517 = vadd.f32 %v495, %v504
        %v518 = vadd.f32 %v496, %v504
        %v519 = vadd.f32 %v497, %v504
        %v520 = vadd.f32 %v498, %v504
        %v521 = vadd.f32 %v499, %v504
        %v522 = vmax.f32 %v506, 0.0
        %v523 = vmax.f32 %v507, 0.0
        %v524 = vmax.f32 %v508, 0.0
        %v525 = vmax.f32 %v509, 0.0
        %v526 = vmax.f32 %v510, 0.0
        %v527 = vmax.f32 %v511, 0.0
        %v528 = vmax.f32 %v512, 0.0
        %v529 = vmax.f32 %v513, 0.0
        %v530 = vmax.f32 %v514, 0.0
        %v531 = vmax.f32 %v515, 0.0
        %v532 = vmax.f32 %v516, 0.0
        %v533 = vmax.f32 %v517, 0.0
        %v534 = vmax.f32 %v518, 0.0
        %v535 = vmax.f32 %v519, 0.0
        %v536 = vmax.f32 %v520, 0.0
        %v537 = vmax.f32 %v521, 0.0
        %v538 = vld [vmem:[%s427] sm:$0xff]
        %v539 = vld [vmem:[%s427 + $0x8] sm:$0xff]
        %v540 = vmul.f32 %v538, %v482
        %v541 = vmul.f32 %v539, %v482
        %v542 = vadd.f32 %v540, %v504
        %v543 = vadd.f32 %v541, %v504
        %v544 = vmax.f32 %v542, 0.0
        %v545 = vmax.f32 %v543, 0.0
        %p546 = scmp.gt.s32.totalorder %s27, 0
        %s547 = scalar_select %p546, 1, 0
        %s548 = scvt.s32.f32 %s547
        %v549 = vstv %s548
        %v550 = vmul.f32 %v544, %v549
        %v551 = vmul.f32 %v545, %v549
        %v552 = vld [vmem:[%s444] sm:$0xff]
        %v553 = vld [vmem:[%s444 + $0x8] sm:$0xff]
        %v554 = vmul.f32 %v552, %v482
        %v555 = vmul.f32 %v553, %v482
        %v556 = vadd.f32 %v554, %v504
        %v557 = vadd.f32 %v555, %v504
        %v558 = vmax.f32 %v556, 0.0
        %v559 = vmax.f32 %v557, 0.0
        %p560 = scmp.lt.s32.totalorder %s27, 1
        %s561 = scalar_select %p560, 1, 0
        %s562 = scvt.s32.f32 %s561
        %v563 = vstv %s562
        %v564 = vmul.f32 %v558, %v563
        %v565 = vmul.f32 %v559, %v563
        %vm586 = vcmask 1040384
        %v587 = vrot.slane %v550, 7
        %v588 = vrot.slane %v551, 7
        %v589 = vsel %vm586, %v587, %v588
        %v590 = vrot.slane %v522, 7
        %v591 = vrot.slane %v523, 7
        %v592 = vsel %vm586, %v590, %v591
        %v593 = vrot.slane %v524, 7
        %v594 = vrot.slane %v525, 7
        %v595 = vsel %vm586, %v593, %v594
        %v596 = vrot.slane %v526, 7
        %v597 = vrot.slane %v527, 7
        %v598 = vsel %vm586, %v596, %v597
        %v599 = vrot.slane %v528, 7
        %v600 = vrot.slane %v529, 7
        %v601 = vsel %vm586, %v599, %v600
        %v602 = vrot.slane %v530, 7
        %v603 = vrot.slane %v531, 7
        %v604 = vsel %vm586, %v602, %v603
        %v605 = vrot.slane %v532, 7
        %v606 = vrot.slane %v533, 7
        %v607 = vsel %vm586, %v605, %v606
        %v608 = vrot.slane %v534, 7
        %v609 = vrot.slane %v535, 7
        %v610 = vsel %vm586, %v608, %v609
        %v611 = vrot.slane %v536, 7
        %v612 = vrot.slane %v537, 7
        %v613 = vsel %vm586, %v611, %v612
        %v614 = vrot.slane %v564, 7
        %v615 = vrot.slane %v565, 7
        %v616 = vsel %vm586, %v614, %v615
        %v647 = vsel %vm586, 0.0, %v587
        %v648 = vsel %vm586, 0.0, %v590
        %v649 = vsel %vm586, 0.0, %v593
        %v650 = vsel %vm586, 0.0, %v596
        %v651 = vsel %vm586, 0.0, %v599
        %v652 = vsel %vm586, 0.0, %v602
        %v653 = vsel %vm586, 0.0, %v605
        %v654 = vsel %vm586, 0.0, %v608
        %v655 = vsel %vm586, 0.0, %v611
        %v656 = vsel %vm586, 0.0, %v614
        %v657 = vsel %vm586, %v588, 0.0
        %v658 = vsel %vm586, %v591, 0.0
        %v659 = vsel %vm586, %v594, 0.0
        %v660 = vsel %vm586, %v597, 0.0
        %v661 = vsel %vm586, %v600, 0.0
        %v662 = vsel %vm586, %v603, 0.0
        %v663 = vsel %vm586, %v606, 0.0
        %v664 = vsel %vm586, %v609, 0.0
        %v665 = vsel %vm586, %v612, 0.0
        %v666 = vsel %vm586, %v615, 0.0
        %vm683 = vcmask 1046528
        %v684 = vrot.slane %v647, 1
        %v685 = vrot.slane %v589, 1
        %v686 = vsel %vm683, %v684, %v685
        %v687 = vrot.slane %v657, 1
        %v688 = vsel %vm683, %v685, %v687
        %v689 = vrot.slane %v648, 1
        %v690 = vrot.slane %v592, 1
        %v691 = vsel %vm683, %v689, %v690
        %v692 = vrot.slane %v658, 1
        %v693 = vsel %vm683, %v690, %v692
        %v694 = vrot.slane %v649, 1
        %v695 = vrot.slane %v595, 1
        %v696 = vsel %vm683, %v694, %v695
        %v697 = vrot.slane %v659, 1
        %v698 = vsel %vm683, %v695, %v697
        %v699 = vrot.slane %v650, 1
        %v700 = vrot.slane %v598, 1
        %v701 = vsel %vm683, %v699, %v700
        %v702 = vrot.slane %v660, 1
        %v703 = vsel %vm683, %v700, %v702
        %v704 = vrot.slane %v651, 1
        %v705 = vrot.slane %v601, 1
        %v706 = vsel %vm683, %v704, %v705
        %v707 = vrot.slane %v661, 1
        %v708 = vsel %vm683, %v705, %v707
        %v709 = vrot.slane %v652, 1
        %v710 = vrot.slane %v604, 1
        %v711 = vsel %vm683, %v709, %v710
        %v712 = vrot.slane %v662, 1
        %v713 = vsel %vm683, %v710, %v712
        %v714 = vrot.slane %v653, 1
        %v715 = vrot.slane %v607, 1
        %v716 = vsel %vm683, %v714, %v715
        %v717 = vrot.slane %v663, 1
        %v718 = vsel %vm683, %v715, %v717
        %v719 = vrot.slane %v654, 1
        %v720 = vrot.slane %v610, 1
        %v721 = vsel %vm683, %v719, %v720
        %v722 = vrot.slane %v664, 1
        %v723 = vsel %vm683, %v720, %v722
        %724 = vrot.lane.b32.xlu0 %v686, 4
        %v725 = vpop.permute.xlu0 %724
        %726 = vrot.lane.b32.xlu0 %v688, 4
        %v727 = vpop.permute.xlu0 %726
        %728 = vrot.lane.b32.xlu0 %v691, 4
        %v729 = vpop.permute.xlu0 %728
        %730 = vrot.lane.b32.xlu0 %v693, 4
        %v731 = vpop.permute.xlu0 %730
        %732 = vrot.lane.b32.xlu0 %v696, 4
        %v733 = vpop.permute.xlu0 %732
        %734 = vrot.lane.b32.xlu0 %v698, 4
        %v735 = vpop.permute.xlu0 %734
        %736 = vrot.lane.b32.xlu0 %v701, 4
        %v737 = vpop.permute.xlu0 %736
        %738 = vrot.lane.b32.xlu0 %v703, 4
        %v739 = vpop.permute.xlu0 %738
        %740 = vrot.lane.b32.xlu0 %v706, 4
        %v741 = vpop.permute.xlu0 %740
        %742 = vrot.lane.b32.xlu0 %v708, 4
        %v743 = vpop.permute.xlu0 %742
        %744 = vrot.lane.b32.xlu0 %v711, 4
        %v745 = vpop.permute.xlu0 %744
        %746 = vrot.lane.b32.xlu0 %v713, 4
        %v747 = vpop.permute.xlu0 %746
        %748 = vrot.lane.b32.xlu0 %v716, 4
        %v749 = vpop.permute.xlu0 %748
        %750 = vrot.lane.b32.xlu0 %v718, 4
        %v751 = vpop.permute.xlu0 %750
        %752 = vrot.lane.b32.xlu0 %v721, 4
        %v753 = vpop.permute.xlu0 %752
        %754 = vrot.lane.b32.xlu0 %v723, 4
        %v755 = vpop.permute.xlu0 %754
        %vm772 = vcmask 1045504
        %v773 = vrot.slane %v647, 2
        %v774 = vrot.slane %v589, 2
        %v775 = vsel %vm772, %v773, %v774
        %v776 = vrot.slane %v657, 2
        %v777 = vsel %vm772, %v774, %v776
        %v778 = vrot.slane %v648, 2
        %v779 = vrot.slane %v592, 2
        %v780 = vsel %vm772, %v778, %v779
        %v781 = vrot.slane %v658, 2
        %v782 = vsel %vm772, %v779, %v781
        %v783 = vrot.slane %v649, 2
        %v784 = vrot.slane %v595, 2
        %v785 = vsel %vm772, %v783, %v784
        %v786 = vrot.slane %v659, 2
        %v787 = vsel %vm772, %v784, %v786
        %v788 = vrot.slane %v650, 2
        %v789 = vrot.slane %v598, 2
        %v790 = vsel %vm772, %v788, %v789
        %v791 = vrot.slane %v660, 2
        %v792 = vsel %vm772, %v789, %v791
        %v793 = vrot.slane %v651, 2
        %v794 = vrot.slane %v601, 2
        %v795 = vsel %vm772, %v793, %v794
        %v796 = vrot.slane %v661, 2
        %v797 = vsel %vm772, %v794, %v796
        %v798 = vrot.slane %v652, 2
        %v799 = vrot.slane %v604, 2
        %v800 = vsel %vm772, %v798, %v799
        %v801 = vrot.slane %v662, 2
        %v802 = vsel %vm772, %v799, %v801
        %v803 = vrot.slane %v653, 2
        %v804 = vrot.slane %v607, 2
        %v805 = vsel %vm772, %v803, %v804
        %v806 = vrot.slane %v663, 2
        %v807 = vsel %vm772, %v804, %v806
        %v808 = vrot.slane %v654, 2
        %v809 = vrot.slane %v610, 2
        %v810 = vsel %vm772, %v808, %v809
        %v811 = vrot.slane %v664, 2
        %v812 = vsel %vm772, %v809, %v811
        %813 = vrot.lane.b32.xlu0 %v775, 8
        %v814 = vpop.permute.xlu0 %813
        %815 = vrot.lane.b32.xlu0 %v777, 8
        %v816 = vpop.permute.xlu0 %815
        %817 = vrot.lane.b32.xlu0 %v780, 8
        %v818 = vpop.permute.xlu0 %817
        %819 = vrot.lane.b32.xlu0 %v782, 8
        %v820 = vpop.permute.xlu0 %819
        %821 = vrot.lane.b32.xlu0 %v785, 8
        %v822 = vpop.permute.xlu0 %821
        %823 = vrot.lane.b32.xlu0 %v787, 8
        %v824 = vpop.permute.xlu0 %823
        %825 = vrot.lane.b32.xlu0 %v790, 8
        %v826 = vpop.permute.xlu0 %825
        %827 = vrot.lane.b32.xlu0 %v792, 8
        %v828 = vpop.permute.xlu0 %827
        %829 = vrot.lane.b32.xlu0 %v795, 8
        %v830 = vpop.permute.xlu0 %829
        %831 = vrot.lane.b32.xlu0 %v797, 8
        %v832 = vpop.permute.xlu0 %831
        %833 = vrot.lane.b32.xlu0 %v800, 8
        %v834 = vpop.permute.xlu0 %833
        %835 = vrot.lane.b32.xlu0 %v802, 8
        %v836 = vpop.permute.xlu0 %835
        %837 = vrot.lane.b32.xlu0 %v805, 8
        %v838 = vpop.permute.xlu0 %837
        %839 = vrot.lane.b32.xlu0 %v807, 8
        %v840 = vpop.permute.xlu0 %839
        %841 = vrot.lane.b32.xlu0 %v810, 8
        %v842 = vpop.permute.xlu0 %841
        %843 = vrot.lane.b32.xlu0 %v812, 8
        %v844 = vpop.permute.xlu0 %843
        %vm861 = vcmask 31744
        %v862 = vsel %vm861, %v647, %v725
        %v863 = vsel %vm861, %v589, %v727
        %v864 = vsel %vm861, %v648, %v729
        %v865 = vsel %vm861, %v592, %v731
        %v866 = vsel %vm861, %v649, %v733
        %v867 = vsel %vm861, %v595, %v735
        %v868 = vsel %vm861, %v650, %v737
        %v869 = vsel %vm861, %v598, %v739
        %v870 = vsel %vm861, %v651, %v741
        %v871 = vsel %vm861, %v601, %v743
        %v872 = vsel %vm861, %v652, %v745
        %v873 = vsel %vm861, %v604, %v747
        %v874 = vsel %vm861, %v653, %v749
        %v875 = vsel %vm861, %v607, %v751
        %v876 = vsel %vm861, %v654, %v753
        %v877 = vsel %vm861, %v610, %v755
        %vm878 = vcmask 64512
        %v879 = vsel %vm878, %v862, %v814
        %v880 = vsel %vm878, %v863, %v816
        %v881 = vsel %vm878, %v864, %v818
        %v882 = vsel %vm878, %v865, %v820
        %v883 = vsel %vm878, %v866, %v822
        %v884 = vsel %vm878, %v867, %v824
        %v885 = vsel %vm878, %v868, %v826
        %v886 = vsel %vm878, %v869, %v828
        %v887 = vsel %vm878, %v870, %v830
        %v888 = vsel %vm878, %v871, %v832
        %v889 = vsel %vm878, %v872, %v834
        %v890 = vsel %vm878, %v873, %v836
        %v891 = vsel %vm878, %v874, %v838
        %v892 = vsel %vm878, %v875, %v840
        %v893 = vsel %vm878, %v876, %v842
        %v894 = vsel %vm878, %v877, %v844
        %v895 = vld [vmem:[%s5] sm:$0xff]
        %v896 = vld [vmem:[%s5 + $0x8] sm:$0xf]
        %v899 = vrot.slane %v655, 1
        %v900 = vrot.slane %v613, 1
        %v901 = vsel %vm683, %v899, %v900
        %v902 = vrot.slane %v665, 1
        %v903 = vsel %vm683, %v900, %v902
        %904 = vrot.lane.b32.xlu0 %v901, 4
        %v905 = vpop.permute.xlu0 %904
        %906 = vrot.lane.b32.xlu0 %v903, 4
        %v907 = vpop.permute.xlu0 %906
        %v910 = vrot.slane %v655, 2
        %v911 = vrot.slane %v613, 2
        %v912 = vsel %vm772, %v910, %v911
        %v913 = vrot.slane %v665, 2
        %v914 = vsel %vm772, %v911, %v913
        %915 = vrot.lane.b32.xlu0 %v912, 8
        %v916 = vpop.permute.xlu0 %915
        %917 = vrot.lane.b32.xlu0 %v914, 8
        %v918 = vpop.permute.xlu0 %917
        %v921 = vsel %vm861, %v655, %v905
        %v922 = vsel %vm861, %v613, %v907
        %v923 = vsel %vm878, %v921, %v916
        %v924 = vsel %vm878, %v922, %v918
        %s925 = scalar_lea.vmem %s5, 16
        %v926 = vld [vmem:[%s925] sm:$0xff]
        %v927 = vld [vmem:[%s925 + $0x8] sm:$0xf]
        %vm928 = vcmask 97280
        %v930 = vsel %vm928, %v881, 0
        %v933 = vsel %vm928, %v882, 0
        %v936 = vsel %vm928, %v883, 0
        %v939 = vsel %vm928, %v884, 0
        %v942 = vsel %vm928, %v885, 0
        %v945 = vsel %vm928, %v886, 0
        %v948 = vsel %vm928, %v887, 0
        %v951 = vsel %vm928, %v888, 0
        %v954 = vsel %vm928, %v889, 0
        %v957 = vsel %vm928, %v890, 0
        %v960 = vsel %vm928, %v891, 0
        %v963 = vsel %vm928, %v892, 0
        %v966 = vsel %vm928, %v893, 0
        %v969 = vsel %vm928, %v894, 0
        %v972 = vsel %vm928, %v923, 0
        %v975 = vsel %vm928, %v924, 0
        %vm977 = vcmask 1043456
        %v979 = vsel %vm977, %v927, 0
        %981 = vmatprep.subr.mxu0 0.0
        %982 = vmatpush1.msra.mxu0 0.0
        %983 = vmatprep.subr.mxu0 0.0
        %984 = vmatpush1.msra.mxu0 0.0
        %985 = vmatprep.subr.mxu0 0.0
        %986 = vmatpush1.msra.mxu0 0.0
        %987 = vmatprep.subr.mxu0 0.0
        %988 = vmatpush1.msra.mxu0 0.0
        %989 = vmatprep.subr.mxu0 0.0
        %990 = vmatpush1.msra.mxu0 0.0
        %991 = vmatprep.subr.mxu0 0.0
        %992 = vmatpush1.msra.mxu0 0.0
        %993 = vmatprep.subr.mxu0 0.0
        %994 = vmatpush1.msra.mxu0 0.0
        %995 = vmatprep.subr.mxu0 0.0
        %996 = vmatpush1.msra.mxu0 0.0
        %997 = vmatprep.subr.mxu0 0.0
        %998 = vmatpush1.msra.mxu0 0.0
        %999 = vmatprep.subr.mxu0 0.0
        %1000 = vmatpush1.msra.mxu0 0.0
        %1001 = vmatprep.subr.mxu0 0.0
        %1002 = vmatpush1.msra.mxu0 0.0
        %1003 = vmatprep.subr.mxu0 0.0
        %1004 = vmatpush1.msra.mxu0 0.0
        %1005 = vmatprep.subr.mxu0 0.0
        %1006 = vmatpush1.msra.mxu0 0.0
        %1007 = vmatprep.subr.mxu0 0.0
        %1008 = vmatpush1.msra.mxu0 0.0
        %1009 = vmatprep.subr.mxu0 0.0
        %1010 = vmatpush1.msra.mxu0 %v979
        %1011 = vmatprep.subr.mxu0 0.0
        %1012 = vmatpush1.msra.mxu0 %v926
        %1013 = vmatprep.subr.mxu0 0.0
        %1014 = vmatpush2.msra.mxu0 0.0
        %1015 = vmatprep.subr.mxu0 0.0
        %1016 = vmatpush2.msra.mxu0 0.0
        %1017 = vmatprep.subr.mxu0 0.0
        %1018 = vmatpush2.msra.mxu0 0.0
        %1019 = vmatprep.subr.mxu0 0.0
        %1020 = vmatpush2.msra.mxu0 0.0
        %1021 = vmatprep.subr.mxu0 0.0
        %1022 = vmatpush2.msra.mxu0 0.0
        %1023 = vmatprep.subr.mxu0 0.0
        %1024 = vmatpush2.msra.mxu0 0.0
        %1025 = vmatprep.subr.mxu0 0.0
        %1026 = vmatpush2.msra.mxu0 0.0
        %1027 = vmatprep.subr.mxu0 0.0
        %1028 = vmatpush2.msra.mxu0 0.0
        %1029 = vmatprep.subr.mxu0 0.0
        %1030 = vmatpush2.msra.mxu0 0.0
        %1031 = vmatprep.subr.mxu0 0.0
        %1032 = vmatpush2.msra.mxu0 0.0
        %1033 = vmatprep.subr.mxu0 0.0
        %1034 = vmatpush2.msra.mxu0 0.0
        %1035 = vmatprep.subr.mxu0 0.0
        %1036 = vmatpush2.msra.mxu0 0.0
        %1037 = vmatprep.subr.mxu0 0.0
        %1038 = vmatpush2.msra.mxu0 0.0
        %1039 = vmatprep.subr.mxu0 0.0
        %1040 = vmatpush2.msra.mxu0 0.0
        %1041 = vmatprep.subr.mxu0 0.0
        %1042 = vmatpush2.msra.mxu0 0.0
        %1043 = vmatprep.subr.mxu0 0.0
        %1044 = vmatpush2.msra.mxu0 0.0
        %1045 = vmatprep.mubr.f32.mxu0 0.0
        %1046 = vmatmul.mubr.f32.gmra.mxu0 %v930
        %v1047 = vpop.f32.mrf.mxu0
        %v1048 = vadd.f32 0.0, %v1047
        %v1049 = vpop.f32.mrf.mxu0
        %1050 = vmatprep.mubr.f32.mxu0 0.0
        %1051 = vmatmul.mubr.f32.gmra.mxu0 %v933
        %v1052 = vpop.f32.mrf.mxu0
        %v1053 = vadd.f32 0.0, %v1052
        %v1054 = vpop.f32.mrf.mxu0
        %1055 = vmatprep.mubr.f32.mxu0 0.0
        %1056 = vmatmul.mubr.f32.gmra.mxu0 %v936
        %v1057 = vpop.f32.mrf.mxu0
        %v1058 = vadd.f32 0.0, %v1057
        %v1059 = vpop.f32.mrf.mxu0
        %1060 = vmatprep.mubr.f32.mxu0 0.0
        %1061 = vmatmul.mubr.f32.gmra.mxu0 %v939
        %v1062 = vpop.f32.mrf.mxu0
        %v1063 = vadd.f32 0.0, %v1062
        %v1064 = vpop.f32.mrf.mxu0
        %1065 = vmatprep.mubr.f32.mxu0 0.0
        %1066 = vmatmul.mubr.f32.gmra.mxu0 %v942
        %v1067 = vpop.f32.mrf.mxu0
        %v1068 = vadd.f32 0.0, %v1067
        %v1069 = vpop.f32.mrf.mxu0
        %1070 = vmatprep.mubr.f32.mxu0 0.0
        %1071 = vmatmul.mubr.f32.gmra.mxu0 %v945
        %v1072 = vpop.f32.mrf.mxu0
        %v1073 = vadd.f32 0.0, %v1072
        %v1074 = vpop.f32.mrf.mxu0
        %1075 = vmatprep.mubr.f32.mxu0 0.0
        %1076 = vmatmul.mubr.f32.gmra.mxu0 %v948
        %v1077 = vpop.f32.mrf.mxu0
        %v1078 = vadd.f32 0.0, %v1077
        %v1079 = vpop.f32.mrf.mxu0
        %1080 = vmatprep.mubr.f32.mxu0 0.0
        %1081 = vmatmul.mubr.f32.gmra.mxu0 %v951
        %v1082 = vpop.f32.mrf.mxu0
        %v1083 = vadd.f32 0.0, %v1082
        %v1084 = vpop.f32.mrf.mxu0
        %1085 = vmatprep.mubr.f32.mxu0 0.0
        %1086 = vmatmul.mubr.f32.gmra.mxu0 %v954
        %v1087 = vpop.f32.mrf.mxu0
        %v1088 = vadd.f32 0.0, %v1087
        %v1089 = vpop.f32.mrf.mxu0
        %1090 = vmatprep.mubr.f32.mxu0 0.0
        %1091 = vmatmul.mubr.f32.gmra.mxu0 %v957
        %v1092 = vpop.f32.mrf.mxu0
        %v1093 = vadd.f32 0.0, %v1092
        %v1094 = vpop.f32.mrf.mxu0
        %1095 = vmatprep.mubr.f32.mxu0 0.0
        %1096 = vmatmul.mubr.f32.gmra.mxu0 %v960
        %v1097 = vpop.f32.mrf.mxu0
        %v1098 = vadd.f32 0.0, %v1097
        %v1099 = vpop.f32.mrf.mxu0
        %1100 = vmatprep.mubr.f32.mxu0 0.0
        %1101 = vmatmul.mubr.f32.gmra.mxu0 %v963
        %v1102 = vpop.f32.mrf.mxu0
        %v1103 = vadd.f32 0.0, %v1102
        %v1104 = vpop.f32.mrf.mxu0
        %1105 = vmatprep.mubr.f32.mxu0 0.0
        %1106 = vmatmul.mubr.f32.gmra.mxu0 %v966
        %v1107 = vpop.f32.mrf.mxu0
        %v1108 = vadd.f32 0.0, %v1107
        %v1109 = vpop.f32.mrf.mxu0
        %1110 = vmatprep.mubr.f32.mxu0 0.0
        %1111 = vmatmul.mubr.f32.gmra.mxu0 %v969
        %v1112 = vpop.f32.mrf.mxu0
        %v1113 = vadd.f32 0.0, %v1112
        %v1114 = vpop.f32.mrf.mxu0
        %1115 = vmatprep.mubr.f32.mxu0 0.0
        %1116 = vmatmul.mubr.f32.gmra.mxu0 %v972
        %v1117 = vpop.f32.mrf.mxu0
        %v1118 = vadd.f32 0.0, %v1117
        %v1119 = vpop.f32.mrf.mxu0
        %1120 = vmatprep.mubr.f32.mxu0 0.0
        %1121 = vmatmul.mubr.f32.gmra.mxu0 %v975
        %v1122 = vpop.f32.mrf.mxu0
        %v1123 = vadd.f32 0.0, %v1122
        %v1124 = vpop.f32.mrf.mxu0
        %1125 = vdwg.mxu0
        %v1127 = vsel %vm928, %v879, 0
        %v1130 = vsel %vm928, %v880, 0
        %v1133 = vsel %vm977, %v896, 0
        %1135 = vmatprep.subr.mxu0 0.0
        %1136 = vmatpush1.msra.mxu0 0.0
        %1137 = vmatprep.subr.mxu0 0.0
        %1138 = vmatpush1.msra.mxu0 0.0
        %1139 = vmatprep.subr.mxu0 0.0
        %1140 = vmatpush1.msra.mxu0 0.0
        %1141 = vmatprep.subr.mxu0 0.0
        %1142 = vmatpush1.msra.mxu0 0.0
        %1143 = vmatprep.subr.mxu0 0.0
        %1144 = vmatpush1.msra.mxu0 0.0
        %1145 = vmatprep.subr.mxu0 0.0
        %1146 = vmatpush1.msra.mxu0 0.0
        %1147 = vmatprep.subr.mxu0 0.0
        %1148 = vmatpush1.msra.mxu0 0.0
        %1149 = vmatprep.subr.mxu0 0.0
        %1150 = vmatpush1.msra.mxu0 0.0
        %1151 = vmatprep.subr.mxu0 0.0
        %1152 = vmatpush1.msra.mxu0 0.0
        %1153 = vmatprep.subr.mxu0 0.0
        %1154 = vmatpush1.msra.mxu0 0.0
        %1155 = vmatprep.subr.mxu0 0.0
        %1156 = vmatpush1.msra.mxu0 0.0
        %1157 = vmatprep.subr.mxu0 0.0
        %1158 = vmatpush1.msra.mxu0 0.0
        %1159 = vmatprep.subr.mxu0 0.0
        %1160 = vmatpush1.msra.mxu0 0.0
        %1161 = vmatprep.subr.mxu0 0.0
        %1162 = vmatpush1.msra.mxu0 0.0
        %1163 = vmatprep.subr.mxu0 0.0
        %1164 = vmatpush1.msra.mxu0 %v1133
        %1165 = vmatprep.subr.mxu0 0.0
        %1166 = vmatpush1.msra.mxu0 %v895
        %1167 = vmatprep.subr.mxu0 0.0
        %1168 = vmatpush2.msra.mxu0 0.0
        %1169 = vmatprep.subr.mxu0 0.0
        %1170 = vmatpush2.msra.mxu0 0.0
        %1171 = vmatprep.subr.mxu0 0.0
        %1172 = vmatpush2.msra.mxu0 0.0
        %1173 = vmatprep.subr.mxu0 0.0
        %1174 = vmatpush2.msra.mxu0 0.0
        %1175 = vmatprep.subr.mxu0 0.0
        %1176 = vmatpush2.msra.mxu0 0.0
        %1177 = vmatprep.subr.mxu0 0.0
        %1178 = vmatpush2.msra.mxu0 0.0
        %1179 = vmatprep.subr.mxu0 0.0
        %1180 = vmatpush2.msra.mxu0 0.0
        %1181 = vmatprep.subr.mxu0 0.0
        %1182 = vmatpush2.msra.mxu0 0.0
        %1183 = vmatprep.subr.mxu0 0.0
        %1184 = vmatpush2.msra.mxu0 0.0
        %1185 = vmatprep.subr.mxu0 0.0
        %1186 = vmatpush2.msra.mxu0 0.0
        %1187 = vmatprep.subr.mxu0 0.0
        %1188 = vmatpush2.msra.mxu0 0.0
        %1189 = vmatprep.subr.mxu0 0.0
        %1190 = vmatpush2.msra.mxu0 0.0
        %1191 = vmatprep.subr.mxu0 0.0
        %1192 = vmatpush2.msra.mxu0 0.0
        %1193 = vmatprep.subr.mxu0 0.0
        %1194 = vmatpush2.msra.mxu0 0.0
        %1195 = vmatprep.subr.mxu0 0.0
        %1196 = vmatpush2.msra.mxu0 0.0
        %1197 = vmatprep.subr.mxu0 0.0
        %1198 = vmatpush2.msra.mxu0 0.0
        %1199 = vmatprep.mubr.f32.mxu0 0.0
        %1200 = vmatmul.mubr.f32.gmra.mxu0 %v1127
        %v1201 = vpop.f32.mrf.mxu0
        %v1202 = vadd.f32 %v1048, %v1201
        %v1203 = vpop.f32.mrf.mxu0
        %1204 = vmatprep.mubr.f32.mxu0 0.0
        %1205 = vmatmul.mubr.f32.gmra.mxu0 %v1130
        %v1206 = vpop.f32.mrf.mxu0
        %v1207 = vadd.f32 %v1053, %v1206
        %v1208 = vpop.f32.mrf.mxu0
        %1209 = vmatprep.mubr.f32.mxu0 0.0
        %1210 = vmatmul.mubr.f32.gmra.mxu0 %v930
        %v1211 = vpop.f32.mrf.mxu0
        %v1212 = vadd.f32 %v1058, %v1211
        %v1213 = vpop.f32.mrf.mxu0
        %1214 = vmatprep.mubr.f32.mxu0 0.0
        %1215 = vmatmul.mubr.f32.gmra.mxu0 %v933
        %v1216 = vpop.f32.mrf.mxu0
        %v1217 = vadd.f32 %v1063, %v1216
        %v1218 = vpop.f32.mrf.mxu0
        %1219 = vmatprep.mubr.f32.mxu0 0.0
        %1220 = vmatmul.mubr.f32.gmra.mxu0 %v936
        %v1221 = vpop.f32.mrf.mxu0
        %v1222 = vadd.f32 %v1068, %v1221
        %v1223 = vpop.f32.mrf.mxu0
        %1224 = vmatprep.mubr.f32.mxu0 0.0
        %1225 = vmatmul.mubr.f32.gmra.mxu0 %v939
        %v1226 = vpop.f32.mrf.mxu0
        %v1227 = vadd.f32 %v1073, %v1226
        %v1228 = vpop.f32.mrf.mxu0
        %1229 = vmatprep.mubr.f32.mxu0 0.0
        %1230 = vmatmul.mubr.f32.gmra.mxu0 %v942
        %v1231 = vpop.f32.mrf.mxu0
        %v1232 = vadd.f32 %v1078, %v1231
        %v1233 = vpop.f32.mrf.mxu0
        %1234 = vmatprep.mubr.f32.mxu0 0.0
        %1235 = vmatmul.mubr.f32.gmra.mxu0 %v945
        %v1236 = vpop.f32.mrf.mxu0
        %v1237 = vadd.f32 %v1083, %v1236
        %v1238 = vpop.f32.mrf.mxu0
        %1239 = vmatprep.mubr.f32.mxu0 0.0
        %1240 = vmatmul.mubr.f32.gmra.mxu0 %v948
        %v1241 = vpop.f32.mrf.mxu0
        %v1242 = vadd.f32 %v1088, %v1241
        %v1243 = vpop.f32.mrf.mxu0
        %1244 = vmatprep.mubr.f32.mxu0 0.0
        %1245 = vmatmul.mubr.f32.gmra.mxu0 %v951
        %v1246 = vpop.f32.mrf.mxu0
        %v1247 = vadd.f32 %v1093, %v1246
        %v1248 = vpop.f32.mrf.mxu0
        %1249 = vmatprep.mubr.f32.mxu0 0.0
        %1250 = vmatmul.mubr.f32.gmra.mxu0 %v954
        %v1251 = vpop.f32.mrf.mxu0
        %v1252 = vadd.f32 %v1098, %v1251
        %v1253 = vpop.f32.mrf.mxu0
        %1254 = vmatprep.mubr.f32.mxu0 0.0
        %1255 = vmatmul.mubr.f32.gmra.mxu0 %v957
        %v1256 = vpop.f32.mrf.mxu0
        %v1257 = vadd.f32 %v1103, %v1256
        %v1258 = vpop.f32.mrf.mxu0
        %1259 = vmatprep.mubr.f32.mxu0 0.0
        %1260 = vmatmul.mubr.f32.gmra.mxu0 %v960
        %v1261 = vpop.f32.mrf.mxu0
        %v1262 = vadd.f32 %v1108, %v1261
        %v1263 = vpop.f32.mrf.mxu0
        %1264 = vmatprep.mubr.f32.mxu0 0.0
        %1265 = vmatmul.mubr.f32.gmra.mxu0 %v963
        %v1266 = vpop.f32.mrf.mxu0
        %v1267 = vadd.f32 %v1113, %v1266
        %v1268 = vpop.f32.mrf.mxu0
        %1269 = vmatprep.mubr.f32.mxu0 0.0
        %1270 = vmatmul.mubr.f32.gmra.mxu0 %v966
        %v1271 = vpop.f32.mrf.mxu0
        %v1272 = vadd.f32 %v1118, %v1271
        %v1273 = vpop.f32.mrf.mxu0
        %1274 = vmatprep.mubr.f32.mxu0 0.0
        %1275 = vmatmul.mubr.f32.gmra.mxu0 %v969
        %v1276 = vpop.f32.mrf.mxu0
        %v1277 = vadd.f32 %v1123, %v1276
        %v1278 = vpop.f32.mrf.mxu0
        %1279 = vdwg.mxu0
        %v1282 = vrot.slane %v656, 1
        %v1283 = vrot.slane %v616, 1
        %v1284 = vsel %vm683, %v1282, %v1283
        %v1285 = vrot.slane %v666, 1
        %v1286 = vsel %vm683, %v1283, %v1285
        %1287 = vrot.lane.b32.xlu0 %v1284, 4
        %v1288 = vpop.permute.xlu0 %1287
        %1289 = vrot.lane.b32.xlu0 %v1286, 4
        %v1290 = vpop.permute.xlu0 %1289
        %v1293 = vrot.slane %v656, 2
        %v1294 = vrot.slane %v616, 2
        %v1295 = vsel %vm772, %v1293, %v1294
        %v1296 = vrot.slane %v666, 2
        %v1297 = vsel %vm772, %v1294, %v1296
        %1298 = vrot.lane.b32.xlu0 %v1295, 8
        %v1299 = vpop.permute.xlu0 %1298
        %1300 = vrot.lane.b32.xlu0 %v1297, 8
        %v1301 = vpop.permute.xlu0 %1300
        %v1304 = vsel %vm861, %v656, %v1288
        %v1305 = vsel %vm861, %v616, %v1290
        %v1306 = vsel %vm878, %v1304, %v1299
        %v1307 = vsel %vm878, %v1305, %v1301
        %s1308 = scalar_lea.vmem %s5, 32
        %v1309 = vld [vmem:[%s1308] sm:$0xff]
        %v1310 = vld [vmem:[%s1308 + $0x8] sm:$0xf]
        %v1312 = vsel %vm928, %v1306, 0
        %v1315 = vsel %vm928, %v1307, 0
        %v1318 = vsel %vm977, %v1310, 0
        %1320 = vmatprep.subr.mxu0 0.0
        %1321 = vmatpush1.msra.mxu0 0.0
        %1322 = vmatprep.subr.mxu0 0.0
        %1323 = vmatpush1.msra.mxu0 0.0
        %1324 = vmatprep.subr.mxu0 0.0
        %1325 = vmatpush1.msra.mxu0 0.0
        %1326 = vmatprep.subr.mxu0 0.0
        %1327 = vmatpush1.msra.mxu0 0.0
        %1328 = vmatprep.subr.mxu0 0.0
        %1329 = vmatpush1.msra.mxu0 0.0
        %1330 = vmatprep.subr.mxu0 0.0
        %1331 = vmatpush1.msra.mxu0 0.0
        %1332 = vmatprep.subr.mxu0 0.0
        %1333 = vmatpush1.msra.mxu0 0.0
        %1334 = vmatprep.subr.mxu0 0.0
        %1335 = vmatpush1.msra.mxu0 0.0
        %1336 = vmatprep.subr.mxu0 0.0
        %1337 = vmatpush1.msra.mxu0 0.0
        %1338 = vmatprep.subr.mxu0 0.0
        %1339 = vmatpush1.msra.mxu0 0.0
        %1340 = vmatprep.subr.mxu0 0.0
        %1341 = vmatpush1.msra.mxu0 0.0
        %1342 = vmatprep.subr.mxu0 0.0
        %1343 = vmatpush1.msra.mxu0 0.0
        %1344 = vmatprep.subr.mxu0 0.0
        %1345 = vmatpush1.msra.mxu0 0.0
        %1346 = vmatprep.subr.mxu0 0.0
        %1347 = vmatpush1.msra.mxu0 0.0
        %1348 = vmatprep.subr.mxu0 0.0
        %1349 = vmatpush1.msra.mxu0 %v1318
        %1350 = vmatprep.subr.mxu0 0.0
        %1351 = vmatpush1.msra.mxu0 %v1309
        %1352 = vmatprep.subr.mxu0 0.0
        %1353 = vmatpush2.msra.mxu0 0.0
        %1354 = vmatprep.subr.mxu0 0.0
        %1355 = vmatpush2.msra.mxu0 0.0
        %1356 = vmatprep.subr.mxu0 0.0
        %1357 = vmatpush2.msra.mxu0 0.0
        %1358 = vmatprep.subr.mxu0 0.0
        %1359 = vmatpush2.msra.mxu0 0.0
        %1360 = vmatprep.subr.mxu0 0.0
        %1361 = vmatpush2.msra.mxu0 0.0
        %1362 = vmatprep.subr.mxu0 0.0
        %1363 = vmatpush2.msra.mxu0 0.0
        %1364 = vmatprep.subr.mxu0 0.0
        %1365 = vmatpush2.msra.mxu0 0.0
        %1366 = vmatprep.subr.mxu0 0.0
        %1367 = vmatpush2.msra.mxu0 0.0
        %1368 = vmatprep.subr.mxu0 0.0
        %1369 = vmatpush2.msra.mxu0 0.0
        %1370 = vmatprep.subr.mxu0 0.0
        %1371 = vmatpush2.msra.mxu0 0.0
        %1372 = vmatprep.subr.mxu0 0.0
        %1373 = vmatpush2.msra.mxu0 0.0
        %1374 = vmatprep.subr.mxu0 0.0
        %1375 = vmatpush2.msra.mxu0 0.0
        %1376 = vmatprep.subr.mxu0 0.0
        %1377 = vmatpush2.msra.mxu0 0.0
        %1378 = vmatprep.subr.mxu0 0.0
        %1379 = vmatpush2.msra.mxu0 0.0
        %1380 = vmatprep.subr.mxu0 0.0
        %1381 = vmatpush2.msra.mxu0 0.0
        %1382 = vmatprep.subr.mxu0 0.0
        %1383 = vmatpush2.msra.mxu0 0.0
        %1384 = vmatprep.mubr.f32.mxu0 0.0
        %1385 = vmatmul.mubr.f32.gmra.mxu0 %v936
        %v1386 = vpop.f32.mrf.mxu0
        %v1387 = vadd.f32 0.0, %v1386
        %v1388 = vpop.f32.mrf.mxu0
        %1389 = vmatprep.mubr.f32.mxu0 0.0
        %1390 = vmatmul.mubr.f32.gmra.mxu0 %v939
        %v1391 = vpop.f32.mrf.mxu0
        %v1392 = vadd.f32 0.0, %v1391
        %v1393 = vpop.f32.mrf.mxu0
        %1394 = vmatprep.mubr.f32.mxu0 0.0
        %1395 = vmatmul.mubr.f32.gmra.mxu0 %v942
        %v1396 = vpop.f32.mrf.mxu0
        %v1397 = vadd.f32 0.0, %v1396
        %v1398 = vpop.f32.mrf.mxu0
        %1399 = vmatprep.mubr.f32.mxu0 0.0
        %1400 = vmatmul.mubr.f32.gmra.mxu0 %v945
        %v1401 = vpop.f32.mrf.mxu0
        %v1402 = vadd.f32 0.0, %v1401
        %v1403 = vpop.f32.mrf.mxu0
        %1404 = vmatprep.mubr.f32.mxu0 0.0
        %1405 = vmatmul.mubr.f32.gmra.mxu0 %v948
        %v1406 = vpop.f32.mrf.mxu0
        %v1407 = vadd.f32 0.0, %v1406
        %v1408 = vpop.f32.mrf.mxu0
        %1409 = vmatprep.mubr.f32.mxu0 0.0
        %1410 = vmatmul.mubr.f32.gmra.mxu0 %v951
        %v1411 = vpop.f32.mrf.mxu0
        %v1412 = vadd.f32 0.0, %v1411
        %v1413 = vpop.f32.mrf.mxu0
        %1414 = vmatprep.mubr.f32.mxu0 0.0
        %1415 = vmatmul.mubr.f32.gmra.mxu0 %v954
        %v1416 = vpop.f32.mrf.mxu0
        %v1417 = vadd.f32 0.0, %v1416
        %v1418 = vpop.f32.mrf.mxu0
        %1419 = vmatprep.mubr.f32.mxu0 0.0
        %1420 = vmatmul.mubr.f32.gmra.mxu0 %v957
        %v1421 = vpop.f32.mrf.mxu0
        %v1422 = vadd.f32 0.0, %v1421
        %v1423 = vpop.f32.mrf.mxu0
        %1424 = vmatprep.mubr.f32.mxu0 0.0
        %1425 = vmatmul.mubr.f32.gmra.mxu0 %v960
        %v1426 = vpop.f32.mrf.mxu0
        %v1427 = vadd.f32 0.0, %v1426
        %v1428 = vpop.f32.mrf.mxu0
        %1429 = vmatprep.mubr.f32.mxu0 0.0
        %1430 = vmatmul.mubr.f32.gmra.mxu0 %v963
        %v1431 = vpop.f32.mrf.mxu0
        %v1432 = vadd.f32 0.0, %v1431
        %v1433 = vpop.f32.mrf.mxu0
        %1434 = vmatprep.mubr.f32.mxu0 0.0
        %1435 = vmatmul.mubr.f32.gmra.mxu0 %v966
        %v1436 = vpop.f32.mrf.mxu0
        %v1437 = vadd.f32 0.0, %v1436
        %v1438 = vpop.f32.mrf.mxu0
        %1439 = vmatprep.mubr.f32.mxu0 0.0
        %1440 = vmatmul.mubr.f32.gmra.mxu0 %v969
        %v1441 = vpop.f32.mrf.mxu0
        %v1442 = vadd.f32 0.0, %v1441
        %v1443 = vpop.f32.mrf.mxu0
        %1444 = vmatprep.mubr.f32.mxu0 0.0
        %1445 = vmatmul.mubr.f32.gmra.mxu0 %v972
        %v1446 = vpop.f32.mrf.mxu0
        %v1447 = vadd.f32 0.0, %v1446
        %v1448 = vpop.f32.mrf.mxu0
        %1449 = vmatprep.mubr.f32.mxu0 0.0
        %1450 = vmatmul.mubr.f32.gmra.mxu0 %v975
        %v1451 = vpop.f32.mrf.mxu0
        %v1452 = vadd.f32 0.0, %v1451
        %v1453 = vpop.f32.mrf.mxu0
        %1454 = vmatprep.mubr.f32.mxu0 0.0
        %1455 = vmatmul.mubr.f32.gmra.mxu0 %v1312
        %v1456 = vpop.f32.mrf.mxu0
        %v1457 = vadd.f32 0.0, %v1456
        %v1458 = vpop.f32.mrf.mxu0
        %1459 = vmatprep.mubr.f32.mxu0 0.0
        %1460 = vmatmul.mubr.f32.gmra.mxu0 %v1315
        %v1461 = vpop.f32.mrf.mxu0
        %v1462 = vadd.f32 0.0, %v1461
        %v1463 = vpop.f32.mrf.mxu0
        %1464 = vdwg.mxu0
        %v1465 = vadd.f32 %v1202, %v1387
        %v1466 = vadd.f32 %v1207, %v1392
        %v1467 = vadd.f32 %v1212, %v1397
        %v1468 = vadd.f32 %v1217, %v1402
        %v1469 = vadd.f32 %v1222, %v1407
        %v1470 = vadd.f32 %v1227, %v1412
        %v1471 = vadd.f32 %v1232, %v1417
        %v1472 = vadd.f32 %v1237, %v1422
        %v1473 = vadd.f32 %v1242, %v1427
        %v1474 = vadd.f32 %v1247, %v1432
        %v1475 = vadd.f32 %v1252, %v1437
        %v1476 = vadd.f32 %v1257, %v1442
        %v1477 = vadd.f32 %v1262, %v1447
        %v1478 = vadd.f32 %v1267, %v1452
        %v1479 = vadd.f32 %v1272, %v1457
        %v1480 = vadd.f32 %v1277, %v1462
        %v1481 = vsel %vm861, %v1465, 0.0
        %v1482 = vsel %vm861, %v1466, 0.0
        %v1483 = vadd.f32 %v1481, %v1482
        %v1484 = vsel %vm861, %v1467, 0.0
        %v1485 = vadd.f32 %v1483, %v1484
        %v1486 = vsel %vm861, %v1468, 0.0
        %v1487 = vadd.f32 %v1485, %v1486
        %v1488 = vsel %vm861, %v1469, 0.0
        %v1489 = vadd.f32 %v1487, %v1488
        %v1490 = vsel %vm861, %v1470, 0.0
        %v1491 = vadd.f32 %v1489, %v1490
        %v1492 = vsel %vm861, %v1471, 0.0
        %v1493 = vadd.f32 %v1491, %v1492
        %v1494 = vsel %vm861, %v1472, 0.0
        %v1495 = vadd.f32 %v1493, %v1494
        %v1496 = vsel %vm861, %v1473, 0.0
        %v1497 = vadd.f32 %v1495, %v1496
        %v1498 = vsel %vm861, %v1474, 0.0
        %v1499 = vadd.f32 %v1497, %v1498
        %v1500 = vsel %vm861, %v1475, 0.0
        %v1501 = vadd.f32 %v1499, %v1500
        %v1502 = vsel %vm861, %v1476, 0.0
        %v1503 = vadd.f32 %v1501, %v1502
        %v1504 = vsel %vm861, %v1477, 0.0
        %v1505 = vadd.f32 %v1503, %v1504
        %v1506 = vsel %vm861, %v1478, 0.0
        %v1507 = vadd.f32 %v1505, %v1506
        %v1508 = vsel %vm861, %v1479, 0.0
        %v1509 = vadd.f32 %v1507, %v1508
        %v1510 = vsel %vm861, %v1480, 0.0
        %v1511 = vadd.f32 %v1509, %v1510
        %v1512 = vrot.slane %v1511, 4
        %v1513 = vadd.f32 %v1511, %v1512
        %v1514 = vrot.slane %v1513, 2
        %v1515 = vadd.f32 %v1513, %v1514
        %v1516 = vrot.slane %v1515, 1
        %v1517 = vadd.f32 %v1515, %v1516
        %v1518 = vmul.f32 %v1465, %v1465
        %v1519 = vmul.f32 %v1466, %v1466
        %v1520 = vmul.f32 %v1467, %v1467
        %v1521 = vmul.f32 %v1468, %v1468
        %v1522 = vmul.f32 %v1469, %v1469
        %v1523 = vmul.f32 %v1470, %v1470
        %v1524 = vmul.f32 %v1471, %v1471
        %v1525 = vmul.f32 %v1472, %v1472
        %v1526 = vmul.f32 %v1473, %v1473
        %v1527 = vmul.f32 %v1474, %v1474
        %v1528 = vmul.f32 %v1475, %v1475
        %v1529 = vmul.f32 %v1476, %v1476
        %v1530 = vmul.f32 %v1477, %v1477
        %v1531 = vmul.f32 %v1478, %v1478
        %v1532 = vmul.f32 %v1479, %v1479
        %v1533 = vmul.f32 %v1480, %v1480
        %v1534 = vsel %vm861, %v1518, 0.0
        %v1535 = vsel %vm861, %v1519, 0.0
        %v1536 = vadd.f32 %v1534, %v1535
        %v1537 = vsel %vm861, %v1520, 0.0
        %v1538 = vadd.f32 %v1536, %v1537
        %v1539 = vsel %vm861, %v1521, 0.0
        %v1540 = vadd.f32 %v1538, %v1539
        %v1541 = vsel %vm861, %v1522, 0.0
        %v1542 = vadd.f32 %v1540, %v1541
        %v1543 = vsel %vm861, %v1523, 0.0
        %v1544 = vadd.f32 %v1542, %v1543
        %v1545 = vsel %vm861, %v1524, 0.0
        %v1546 = vadd.f32 %v1544, %v1545
        %v1547 = vsel %vm861, %v1525, 0.0
        %v1548 = vadd.f32 %v1546, %v1547
        %v1549 = vsel %vm861, %v1526, 0.0
        %v1550 = vadd.f32 %v1548, %v1549
        %v1551 = vsel %vm861, %v1527, 0.0
        %v1552 = vadd.f32 %v1550, %v1551
        %v1553 = vsel %vm861, %v1528, 0.0
        %v1554 = vadd.f32 %v1552, %v1553
        %v1555 = vsel %vm861, %v1529, 0.0
        %v1556 = vadd.f32 %v1554, %v1555
        %v1557 = vsel %vm861, %v1530, 0.0
        %v1558 = vadd.f32 %v1556, %v1557
        %v1559 = vsel %vm861, %v1531, 0.0
        %v1560 = vadd.f32 %v1558, %v1559
        %v1561 = vsel %vm861, %v1532, 0.0
        %v1562 = vadd.f32 %v1560, %v1561
        %v1563 = vsel %vm861, %v1533, 0.0
        %v1564 = vadd.f32 %v1562, %v1563
        %v1565 = vrot.slane %v1564, 4
        %v1566 = vadd.f32 %v1564, %v1565
        %v1567 = vrot.slane %v1566, 2
        %v1568 = vadd.f32 %v1566, %v1567
        %v1569 = vrot.slane %v1568, 1
        %v1570 = vadd.f32 %v1568, %v1569
        %v1571 = vsel %vm586, %v1517, %v1570
        %vm1572 = vcmask 25600
        %1573 = vst.msk [vmem:[%s403] sm:$0x3] %vm1572, %v1571
        %1574 = vst.msk [vmem:[%s458] sm:$0xff] %vm861, %v1465
        %1575 = vst.msk [vmem:[%s458 + $0x8] sm:$0xff] %vm861, %v1466
        %1576 = vst.msk [vmem:[%s458 + $0x10] sm:$0xff] %vm861, %v1467
        %1577 = vst.msk [vmem:[%s458 + $0x18] sm:$0xff] %vm861, %v1468
        %1578 = vst.msk [vmem:[%s458 + $0x20] sm:$0xff] %vm861, %v1469
        %1579 = vst.msk [vmem:[%s458 + $0x28] sm:$0xff] %vm861, %v1470
        %1580 = vst.msk [vmem:[%s458 + $0x30] sm:$0xff] %vm861, %v1471
        %1581 = vst.msk [vmem:[%s458 + $0x38] sm:$0xff] %vm861, %v1472
        %1582 = vst.msk [vmem:[%s458 + $0x40] sm:$0xff] %vm861, %v1473
        %1583 = vst.msk [vmem:[%s458 + $0x48] sm:$0xff] %vm861, %v1474
        %1584 = vst.msk [vmem:[%s458 + $0x50] sm:$0xff] %vm861, %v1475
        %1585 = vst.msk [vmem:[%s458 + $0x58] sm:$0xff] %vm861, %v1476
        %1586 = vst.msk [vmem:[%s458 + $0x60] sm:$0xff] %vm861, %v1477
        %1587 = vst.msk [vmem:[%s458 + $0x68] sm:$0xff] %vm861, %v1478
        %1588 = vst.msk [vmem:[%s458 + $0x70] sm:$0xff] %vm861, %v1479
        %1589 = vst.msk [vmem:[%s458 + $0x78] sm:$0xff] %vm861, %v1480
        %s1590 = smul.u32 8, %s27
        %p1591 = scmp.lt.s32.totalorder %s26, 1
        %s1592 = scalar_select %p1591, %s26, 1
        %p1593 = scmp.lt.s32.totalorder %s1590, 15
        %s1594 = scalar_select %p1593, %s1590, 15
        %s1595 = smul.addr %s1594, 2
        %s1596 = smul.addr %s1592, 32
        %s1597 = sadd.s32 %s1595, %s1596
        %s1598 = smul.addr %s1597, 8
        %s1599 = scalar_lea.vmem %s6, %s1598
        %s1600 = sand.u32 %s235, 1
        %s1601 = scalar_lea.sflag [#allocation3], %s1600
        %s1602 = sand.u32 %s235, 1
        %s1603 = smul.addr %s1602, 2
        %s1604 = scalar_lea.vmem [#allocation2], %s1603
        // Predicated region
        $region45: #{tpu_custom_call.1} parent=43 // pred_check
          %p1605 = pneg %p217
        $region46: #{tpu_custom_call.1} parent=43 // pred_check_branch
          %1607 = sbr.rel (%p1605) target = $region48
        $region47: #{tpu_custom_call.1} parent=43 // pred_region
          %s1608 = smul.u32 8, %s27
        $region48: #{tpu_custom_call.1} parent=43 // pred_fallthru
          _
        // Predicated region
        $region49: #{tpu_custom_call.1} parent=43 // pred_check
          %p1609 = pneg %p245
        $region50: #{tpu_custom_call.1} parent=43 // pred_check_branch
          %1611 = sbr.rel (%p1609) target = $region52
        $region51: #{tpu_custom_call.1} parent=43 // pred_region
          %s1613 = ssub.s32 32, 32
          %1614 = vsyncadd %s1601, %s1613
          %s1615 = smul.addr %s26, 2
          %s1616 = sadd.s32 %s27, %s1615
          %s1617 = smul.addr %s1616, 32
          %s1618 = scalar_lea.hbm %s7, %s1617
          %s1620 = sshll.u32 %s1604, 4
          %s1621 = int_to_ptr.vmem [resolvable:$true] %s1620
          %1623 = dma.vmem_to_hbm [thread:$0]  %s1621, 32, %s1618, %s1601
        $region52: #{tpu_custom_call.1} parent=43 // pred_fallthru
          _
      $region44: #{tpu_custom_call.1} parent=5 // pred_fallthru
        _
      %p1624 = scmp.le.s32.totalorder 2, %s17
      // Predicated region
      $region53: #{tpu_custom_call.1} parent=5 // pred_check
        %p1625 = pneg %p1624
      $region54: #{tpu_custom_call.1} parent=5 // pred_check_branch
        %1627 = sbr.rel (%p1625) target = $region56
      $region55: #{tpu_custom_call.1} parent=5 // pred_region
        %s1628 = ssub.s32 %s17, 2
        // Predicated region
        $region57: #{tpu_custom_call.1} parent=55 // pred_check
          %p1629 = pneg %p223
        $region58: #{tpu_custom_call.1} parent=55 // pred_check_branch
          %1631 = sbr.rel (%p1629) target = $region60
        $region59: #{tpu_custom_call.1} parent=55 // pred_region
          %s1632 = smul.u32 8, %s29
          %p1633 = scmp.lt.s32.totalorder %s28, 1
          %s1634 = scalar_select %p1633, %s28, 1
          %p1635 = scmp.lt.s32.totalorder %s1632, 15
          %s1636 = scalar_select %p1635, %s1632, 15
          %s1637 = smul.addr %s1636, 2
          %s1638 = smul.addr %s1634, 32
          %s1639 = sadd.s32 %s1637, %s1638
          %s1640 = smul.addr %s1639, 8
          %s1641 = scalar_lea.vmem %s6, %s1640
        $region60: #{tpu_custom_call.1} parent=55 // pred_fallthru
          _
        // Predicated region
        $region61: #{tpu_custom_call.1} parent=55 // pred_check
          %p1642 = pneg %p251
        $region62: #{tpu_custom_call.1} parent=55 // pred_check_branch
          %1644 = sbr.rel (%p1642) target = $region64
        $region63: #{tpu_custom_call.1} parent=55 // pred_region
          %s1645 = sand.u32 %s236, 1
          %s1646 = scalar_lea.sflag [#allocation3], %s1645
          %s1647 = sand.u32 %s236, 1
          %s1648 = smul.addr %s1647, 2
          %s1649 = scalar_lea.vmem [#allocation2], %s1648
          %1650 = dma.done %s1646, 32
        $region64: #{tpu_custom_call.1} parent=55 // pred_fallthru
          _
      $region56: #{tpu_custom_call.1} parent=5 // pred_fallthru
        _
    $region6: #{tpu_custom_call.1} parent=1 // loop_footer
      %s21 = sadd.s32 1, %s17
    $region7: #{tpu_custom_call.1} parent=1 // loop_footer_branch
      %16 = sbr.rel target = $region3
    $region8: #{tpu_custom_call.1} parent=1 // loop_exit
      _
    %1651 = vsyncpa [#allocation3], 1
    %s1652 = scalar_lea.sflag [#allocation3], 1
    %1653 = vsyncpa %s1652, 1

</llo_original>
